<compile_context>
chip_gen: v5e
topology: v5e:2x2
jax: 0.10.0
libtpu: 0.0.40
codegen_flags: <defaults>
</compile_context>

<pallas_src>
import jax
import jax.numpy as jnp
from jax.experimental import pallas as pl
from jax.experimental.pallas import tpu as pltpu

HIDDEN_UNITS = 50
BN_EPS = 0.8            # nn.BatchNorm1d(n, 0.8) -> eps = 0.8
LRELU_SLOPE = 0.2
LAYER_DIMS = [HIDDEN_UNITS, 64, 128, 256, 512, 784]
OUT_FEATURES = 784
OUT_PADDED = 896        # 784 padded to a multiple of 128 (lane-dense output)


def _pad128(n):
    return ((n + 127) // 128) * 128


# Lane-aligned packing layout for the small per-feature vectors.
_PADDED_OUT = [_pad128(d) for d in LAYER_DIMS[1:]]      # [128, 128, 256, 512, 896]
_SEG_OFF = [0]
for _d in _PADDED_OUT:
    _SEG_OFF.append(_SEG_OFF[-1] + _d)
BIAS_PACKED_WIDTH = _SEG_OFF[5]                          # 1920 (b1..b5)
GB_PACKED_WIDTH = _SEG_OFF[4]                            # 1024 (g1..g4 / be1..be4)


def _generator_kernel(x_ref, w1, w2, w3, w4, w5, bias_ref, gb_ref, out_ref):
    def linear(h, w_ref, layer):
        off = _SEG_OFF[layer]
        width = w_ref.shape[1]
        b = bias_ref[:, off:off + width]                 # f32 bias slice
        # bf16 x bf16 on the MXU, f32 accumulate; bias added in f32.
        acc = jnp.dot(h.astype(jnp.bfloat16), w_ref[...],
                      preferred_element_type=jnp.float32)
        return acc + b

    def lrelu(h):
        # equivalent to where(h>0, h, 0.2*h) for 0 < slope < 1
        return jnp.maximum(h, LRELU_SLOPE * h)

    def batchnorm(h, layer):
        off = _SEG_OFF[layer]
        width = h.shape[1]
        gamma = gb_ref[0:1, off:off + width]
        beta = gb_ref[1:2, off:off + width]
        inv_n = 1.0 / h.shape[0]
        mu = jnp.sum(h, axis=0, keepdims=True) * inv_n
        ex2 = jnp.sum(h * h, axis=0, keepdims=True) * inv_n
        var = ex2 - mu * mu                              # biased batch variance
        return (h - mu) * jax.lax.rsqrt(var + BN_EPS) * gamma + beta

    h = x_ref[...].astype(jnp.float32)
    h = batchnorm(lrelu(linear(h, w1, 0)), 0)
    h = batchnorm(lrelu(linear(h, w2, 1)), 1)
    h = batchnorm(lrelu(linear(h, w3, 2)), 2)
    h = batchnorm(lrelu(linear(h, w4, 3)), 3)
    h = jnp.tanh(linear(h, w5, 4))                       # (B, 896), pad cols -> tanh(0)=0
    out_ref[...] = h.astype(out_ref.dtype)


def init_params(key):
    """PyTorch-style init U(-1/sqrt(fan_in), 1/sqrt(fan_in)); weights bf16,
    biases/gamma/beta packed into lane-aligned f32 slabs."""
    weights, biases, gammas, betas = [], [], [], []
    for i in range(5):
        fan_in, fan_out = LAYER_DIMS[i], LAYER_DIMS[i + 1]
        key, kw, kb = jax.random.split(key, 3)
        bound = 1.0 / float(fan_in) ** 0.5
        w = jax.random.uniform(kw, (fan_in, fan_out), jnp.float32, -bound, bound)
        b = jax.random.uniform(kb, (fan_out,), jnp.float32, -bound, bound)
        if i == 4:
            # pad final layer to 896 output columns (zeros -> tanh(0)=0, sliced off later)
            w = jnp.pad(w, ((0, 0), (0, OUT_PADDED - fan_out)))
        weights.append(w.astype(jnp.bfloat16))
        biases.append(jnp.pad(b, (0, _PADDED_OUT[i] - fan_out)))
        if i < 4:
            gammas.append(jnp.pad(jnp.ones((fan_out,), jnp.float32),
                                  (0, _PADDED_OUT[i] - fan_out)))
            betas.append(jnp.pad(jnp.zeros((fan_out,), jnp.float32),
                                 (0, _PADDED_OUT[i] - fan_out)))
    bias_packed = jnp.concatenate(biases)[None, :]                    # (1, 1920)
    gb_packed = jnp.stack([jnp.concatenate(gammas),
                           jnp.concatenate(betas)])                   # (2, 1024)
    return tuple(weights) + (bias_packed, gb_packed)


def generator_forward(x, params):
    B = x.shape[0]
    vmem = pl.BlockSpec(memory_space=pltpu.MemorySpace.VMEM)
    out = pl.pallas_call(
        _generator_kernel,
        out_shape=jax.ShapeDtypeStruct((B, OUT_PADDED), jnp.float32),
        in_specs=[vmem] * (1 + len(params)),
        out_specs=vmem,
        # footprint is ~1.3 MB of bf16 weights + tiny activations; 16 MiB is
        # ample headroom and leaves plenty of physical VMEM on v7x (64 MiB).
        compiler_params=pltpu.CompilerParams(vmem_limit_bytes=16 << 20),
    )(x, *params)
    # Matches PyTorch `.reshape(1, -1, 28, 28)` (drop the 112 pad columns first).
    return out[:, :OUT_FEATURES].reshape(1, -1, 28, 28)


def _reference_forward(x, params):
    """Pure-JAX mirror of the kernel math (same bf16 matmul operands)."""
    w1, w2, w3, w4, w5, bias_packed, gb_packed = params
    ws = [w1, w2, w3, w4, w5]
    h = x.astype(jnp.float32)
    for i in range(5):
        off = _SEG_OFF[i]
        width = ws[i].shape[1]
        b = bias_packed[:, off:off + width]
        h = jnp.dot(h.astype(jnp.bfloat16), ws[i],
                    preferred_element_type=jnp.float32) + b
        if i < 4:
            h = jnp.maximum(h, LRELU_SLOPE * h)
            gamma = gb_packed[0:1, off:off + width]
            beta = gb_packed[1:2, off:off + width]
            mu = jnp.mean(h, axis=0, keepdims=True)
            var = jnp.mean(h * h, axis=0, keepdims=True) - mu * mu
            h = (h - mu) * jax.lax.rsqrt(var + BN_EPS) * gamma + beta
        else:
            h = jnp.tanh(h)
    return h[:, :OUT_FEATURES].reshape(1, -1, 28, 28)


if __name__ == "__main__":
    key = jax.random.PRNGKey(0)
    key_x, key_p = jax.random.split(key)

    batch = 8
    x = jax.random.normal(key_x, (batch, HIDDEN_UNITS), jnp.float32)
    params = init_params(key_p)

    y = generator_forward(x, params)
    y = jax.block_until_ready(y)

    assert y.shape == (1, batch, 28, 28), y.shape
    assert bool(jnp.all(jnp.isfinite(y)))
    assert bool(jnp.all(jnp.abs(y) <= 1.0 + 1e-6))       # tanh range

    y_ref = _reference_forward(x, params)
    assert bool(jnp.allclose(y, y_ref, atol=2e-2, rtol=2e-2))

    print("KERNEL_OK")
</pallas_src>

<mosaic_0001>
module attributes {stable_mosaic.version = 11 : i64} {
  func.func @_generator_kernel(%arg0: memref<8x50xf32, #tpu.memory_space<vmem>>, %arg1: memref<50x64xbf16, #tpu.memory_space<vmem>>, %arg2: memref<64x128xbf16, #tpu.memory_space<vmem>>, %arg3: memref<128x256xbf16, #tpu.memory_space<vmem>>, %arg4: memref<256x512xbf16, #tpu.memory_space<vmem>>, %arg5: memref<512x896xbf16, #tpu.memory_space<vmem>>, %arg6: memref<1x1920xf32, #tpu.memory_space<vmem>>, %arg7: memref<2x1024xf32, #tpu.memory_space<vmem>>, %arg8: memref<8x896xf32, #tpu.memory_space<vmem>>) attributes {dimension_semantics = [], scalar_prefetch = 0 : i64, scratch_operands = 0 : i64, tpu.core_type = #tpu.core_type<tc>} {
    %c0 = arith.constant 0 : index
    %c0_0 = arith.constant 0 : index
    %0 = vector.load %arg0[%c0, %c0_0] : memref<8x50xf32, #tpu.memory_space<vmem>>, vector<8x50xf32>
    %c0_1 = arith.constant 0 : index
    %c0_2 = arith.constant 0 : index
    %1 = vector.load %arg6[%c0_1, %c0_2] : memref<1x1920xf32, #tpu.memory_space<vmem>>, vector<1x64xf32>
    %2 = arith.truncf %0 : vector<8x50xf32> to vector<8x50xbf16>
    %c0_3 = arith.constant 0 : index
    %c0_4 = arith.constant 0 : index
    %3 = vector.load %arg1[%c0_3, %c0_4] : memref<50x64xbf16, #tpu.memory_space<vmem>>, vector<50x64xbf16>
    %cst = arith.constant dense<0.000000e+00> : vector<8x64xf32>
    %4 = tpu.matmul %2, %3, %cst {dimension_numbers = #tpu.dot_dimension_numbers<[1], [0], [0], [1], [0, 0, 1, 1], [], []>} : vector<8x50xbf16>, vector<50x64xbf16>, vector<8x64xf32> -> vector<8x64xf32>
    %5 = vector.broadcast %1 : vector<1x64xf32> to vector<8x64xf32>
    %6 = arith.addf %4, %5 : vector<8x64xf32>
    %cst_5 = arith.constant 2.000000e-01 : f32
    %7 = vector.broadcast %cst_5 : f32 to vector<8x64xf32>
    %8 = arith.mulf %7, %6 : vector<8x64xf32>
    %9 = arith.maximumf %6, %8 : vector<8x64xf32>
    %c0_6 = arith.constant 0 : index
    %c0_7 = arith.constant 0 : index
    %10 = vector.load %arg7[%c0_6, %c0_7] : memref<2x1024xf32, #tpu.memory_space<vmem>>, vector<1x64xf32>
    %c1 = arith.constant 1 : index
    %c0_8 = arith.constant 0 : index
    %11 = vector.load %arg7[%c1, %c0_8] : memref<2x1024xf32, #tpu.memory_space<vmem>>, vector<1x64xf32>
    %cst_9 = arith.constant dense<0.000000e+00> : vector<64xf32>
    %12 = vector.multi_reduction <add>, %9, %cst_9 [0] : vector<8x64xf32> to vector<64xf32>
    %13 = vector.shape_cast %12 : vector<64xf32> to vector<1x64xf32>
    %cst_10 = arith.constant 1.250000e-01 : f32
    %14 = vector.broadcast %cst_10 : f32 to vector<1x64xf32>
    %15 = arith.mulf %13, %14 : vector<1x64xf32>
    %16 = arith.mulf %9, %9 : vector<8x64xf32>
    %cst_11 = arith.constant dense<0.000000e+00> : vector<64xf32>
    %17 = vector.multi_reduction <add>, %16, %cst_11 [0] : vector<8x64xf32> to vector<64xf32>
    %18 = vector.shape_cast %17 : vector<64xf32> to vector<1x64xf32>
    %cst_12 = arith.constant 1.250000e-01 : f32
    %19 = vector.broadcast %cst_12 : f32 to vector<1x64xf32>
    %20 = arith.mulf %18, %19 : vector<1x64xf32>
    %21 = arith.mulf %15, %15 : vector<1x64xf32>
    %22 = arith.subf %20, %21 : vector<1x64xf32>
    %23 = vector.broadcast %15 : vector<1x64xf32> to vector<8x64xf32>
    %24 = arith.subf %9, %23 : vector<8x64xf32>
    %cst_13 = arith.constant 8.000000e-01 : f32
    %25 = vector.broadcast %cst_13 : f32 to vector<1x64xf32>
    %26 = arith.addf %22, %25 : vector<1x64xf32>
    %27 = math.rsqrt %26 : vector<1x64xf32>
    %28 = vector.broadcast %27 : vector<1x64xf32> to vector<8x64xf32>
    %29 = arith.mulf %24, %28 : vector<8x64xf32>
    %30 = vector.broadcast %10 : vector<1x64xf32> to vector<8x64xf32>
    %31 = arith.mulf %29, %30 : vector<8x64xf32>
    %32 = vector.broadcast %11 : vector<1x64xf32> to vector<8x64xf32>
    %33 = arith.addf %31, %32 : vector<8x64xf32>
    %c0_14 = arith.constant 0 : index
    %c128 = arith.constant 128 : index
    %34 = vector.load %arg6[%c0_14, %c128] : memref<1x1920xf32, #tpu.memory_space<vmem>>, vector<1x128xf32>
    %35 = arith.truncf %33 : vector<8x64xf32> to vector<8x64xbf16>
    %c0_15 = arith.constant 0 : index
    %c0_16 = arith.constant 0 : index
    %36 = vector.load %arg2[%c0_15, %c0_16] : memref<64x128xbf16, #tpu.memory_space<vmem>>, vector<64x128xbf16>
    %cst_17 = arith.constant dense<0.000000e+00> : vector<8x128xf32>
    %37 = tpu.matmul %35, %36, %cst_17 {dimension_numbers = #tpu.dot_dimension_numbers<[1], [0], [0], [1], [0, 0, 1, 1], [], []>} : vector<8x64xbf16>, vector<64x128xbf16>, vector<8x128xf32> -> vector<8x128xf32>
    %38 = vector.broadcast %34 : vector<1x128xf32> to vector<8x128xf32>
    %39 = arith.addf %37, %38 : vector<8x128xf32>
    %cst_18 = arith.constant 2.000000e-01 : f32
    %40 = vector.broadcast %cst_18 : f32 to vector<8x128xf32>
    %41 = arith.mulf %40, %39 : vector<8x128xf32>
    %42 = arith.maximumf %39, %41 : vector<8x128xf32>
    %c0_19 = arith.constant 0 : index
    %c128_20 = arith.constant 128 : index
    %43 = vector.load %arg7[%c0_19, %c128_20] : memref<2x1024xf32, #tpu.memory_space<vmem>>, vector<1x128xf32>
    %c1_21 = arith.constant 1 : index
    %c128_22 = arith.constant 128 : index
    %44 = vector.load %arg7[%c1_21, %c128_22] : memref<2x1024xf32, #tpu.memory_space<vmem>>, vector<1x128xf32>
    %cst_23 = arith.constant dense<0.000000e+00> : vector<128xf32>
    %45 = vector.multi_reduction <add>, %42, %cst_23 [0] : vector<8x128xf32> to vector<128xf32>
    %46 = vector.shape_cast %45 : vector<128xf32> to vector<1x128xf32>
    %cst_24 = arith.constant 1.250000e-01 : f32
    %47 = vector.broadcast %cst_24 : f32 to vector<1x128xf32>
    %48 = arith.mulf %46, %47 : vector<1x128xf32>
    %49 = arith.mulf %42, %42 : vector<8x128xf32>
    %cst_25 = arith.constant dense<0.000000e+00> : vector<128xf32>
    %50 = vector.multi_reduction <add>, %49, %cst_25 [0] : vector<8x128xf32> to vector<128xf32>
    %51 = vector.shape_cast %50 : vector<128xf32> to vector<1x128xf32>
    %cst_26 = arith.constant 1.250000e-01 : f32
    %52 = vector.broadcast %cst_26 : f32 to vector<1x128xf32>
    %53 = arith.mulf %51, %52 : vector<1x128xf32>
    %54 = arith.mulf %48, %48 : vector<1x128xf32>
    %55 = arith.subf %53, %54 : vector<1x128xf32>
    %56 = vector.broadcast %48 : vector<1x128xf32> to vector<8x128xf32>
    %57 = arith.subf %42, %56 : vector<8x128xf32>
    %cst_27 = arith.constant 8.000000e-01 : f32
    %58 = vector.broadcast %cst_27 : f32 to vector<1x128xf32>
    %59 = arith.addf %55, %58 : vector<1x128xf32>
    %60 = math.rsqrt %59 : vector<1x128xf32>
    %61 = vector.broadcast %60 : vector<1x128xf32> to vector<8x128xf32>
    %62 = arith.mulf %57, %61 : vector<8x128xf32>
    %63 = vector.broadcast %43 : vector<1x128xf32> to vector<8x128xf32>
    %64 = arith.mulf %62, %63 : vector<8x128xf32>
    %65 = vector.broadcast %44 : vector<1x128xf32> to vector<8x128xf32>
    %66 = arith.addf %64, %65 : vector<8x128xf32>
    %c0_28 = arith.constant 0 : index
    %c256 = arith.constant 256 : index
    %67 = vector.load %arg6[%c0_28, %c256] : memref<1x1920xf32, #tpu.memory_space<vmem>>, vector<1x256xf32>
    %68 = arith.truncf %66 : vector<8x128xf32> to vector<8x128xbf16>
    %c0_29 = arith.constant 0 : index
    %c0_30 = arith.constant 0 : index
    %69 = vector.load %arg3[%c0_29, %c0_30] : memref<128x256xbf16, #tpu.memory_space<vmem>>, vector<128x256xbf16>
    %cst_31 = arith.constant dense<0.000000e+00> : vector<8x256xf32>
    %70 = tpu.matmul %68, %69, %cst_31 {dimension_numbers = #tpu.dot_dimension_numbers<[1], [0], [0], [1], [0, 0, 1, 1], [], []>} : vector<8x128xbf16>, vector<128x256xbf16>, vector<8x256xf32> -> vector<8x256xf32>
    %71 = vector.broadcast %67 : vector<1x256xf32> to vector<8x256xf32>
    %72 = arith.addf %70, %71 : vector<8x256xf32>
    %cst_32 = arith.constant 2.000000e-01 : f32
    %73 = vector.broadcast %cst_32 : f32 to vector<8x256xf32>
    %74 = arith.mulf %73, %72 : vector<8x256xf32>
    %75 = arith.maximumf %72, %74 : vector<8x256xf32>
    %c0_33 = arith.constant 0 : index
    %c256_34 = arith.constant 256 : index
    %76 = vector.load %arg7[%c0_33, %c256_34] : memref<2x1024xf32, #tpu.memory_space<vmem>>, vector<1x256xf32>
    %c1_35 = arith.constant 1 : index
    %c256_36 = arith.constant 256 : index
    %77 = vector.load %arg7[%c1_35, %c256_36] : memref<2x1024xf32, #tpu.memory_space<vmem>>, vector<1x256xf32>
    %cst_37 = arith.constant dense<0.000000e+00> : vector<256xf32>
    %78 = vector.multi_reduction <add>, %75, %cst_37 [0] : vector<8x256xf32> to vector<256xf32>
    %79 = vector.shape_cast %78 : vector<256xf32> to vector<1x256xf32>
    %cst_38 = arith.constant 1.250000e-01 : f32
    %80 = vector.broadcast %cst_38 : f32 to vector<1x256xf32>
    %81 = arith.mulf %79, %80 : vector<1x256xf32>
    %82 = arith.mulf %75, %75 : vector<8x256xf32>
    %cst_39 = arith.constant dense<0.000000e+00> : vector<256xf32>
    %83 = vector.multi_reduction <add>, %82, %cst_39 [0] : vector<8x256xf32> to vector<256xf32>
    %84 = vector.shape_cast %83 : vector<256xf32> to vector<1x256xf32>
    %cst_40 = arith.constant 1.250000e-01 : f32
    %85 = vector.broadcast %cst_40 : f32 to vector<1x256xf32>
    %86 = arith.mulf %84, %85 : vector<1x256xf32>
    %87 = arith.mulf %81, %81 : vector<1x256xf32>
    %88 = arith.subf %86, %87 : vector<1x256xf32>
    %89 = vector.broadcast %81 : vector<1x256xf32> to vector<8x256xf32>
    %90 = arith.subf %75, %89 : vector<8x256xf32>
    %cst_41 = arith.constant 8.000000e-01 : f32
    %91 = vector.broadcast %cst_41 : f32 to vector<1x256xf32>
    %92 = arith.addf %88, %91 : vector<1x256xf32>
    %93 = math.rsqrt %92 : vector<1x256xf32>
    %94 = vector.broadcast %93 : vector<1x256xf32> to vector<8x256xf32>
    %95 = arith.mulf %90, %94 : vector<8x256xf32>
    %96 = vector.broadcast %76 : vector<1x256xf32> to vector<8x256xf32>
    %97 = arith.mulf %95, %96 : vector<8x256xf32>
    %98 = vector.broadcast %77 : vector<1x256xf32> to vector<8x256xf32>
    %99 = arith.addf %97, %98 : vector<8x256xf32>
    %c0_42 = arith.constant 0 : index
    %c512 = arith.constant 512 : index
    %100 = vector.load %arg6[%c0_42, %c512] : memref<1x1920xf32, #tpu.memory_space<vmem>>, vector<1x512xf32>
    %101 = arith.truncf %99 : vector<8x256xf32> to vector<8x256xbf16>
    %c0_43 = arith.constant 0 : index
    %c0_44 = arith.constant 0 : index
    %102 = vector.load %arg4[%c0_43, %c0_44] : memref<256x512xbf16, #tpu.memory_space<vmem>>, vector<256x512xbf16>
    %cst_45 = arith.constant dense<0.000000e+00> : vector<8x512xf32>
    %103 = tpu.matmul %101, %102, %cst_45 {dimension_numbers = #tpu.dot_dimension_numbers<[1], [0], [0], [1], [0, 0, 1, 1], [], []>} : vector<8x256xbf16>, vector<256x512xbf16>, vector<8x512xf32> -> vector<8x512xf32>
    %104 = vector.broadcast %100 : vector<1x512xf32> to vector<8x512xf32>
    %105 = arith.addf %103, %104 : vector<8x512xf32>
    %cst_46 = arith.constant 2.000000e-01 : f32
    %106 = vector.broadcast %cst_46 : f32 to vector<8x512xf32>
    %107 = arith.mulf %106, %105 : vector<8x512xf32>
    %108 = arith.maximumf %105, %107 : vector<8x512xf32>
    %c0_47 = arith.constant 0 : index
    %c512_48 = arith.constant 512 : index
    %109 = vector.load %arg7[%c0_47, %c512_48] : memref<2x1024xf32, #tpu.memory_space<vmem>>, vector<1x512xf32>
    %c1_49 = arith.constant 1 : index
    %c512_50 = arith.constant 512 : index
    %110 = vector.load %arg7[%c1_49, %c512_50] : memref<2x1024xf32, #tpu.memory_space<vmem>>, vector<1x512xf32>
    %cst_51 = arith.constant dense<0.000000e+00> : vector<512xf32>
    %111 = vector.multi_reduction <add>, %108, %cst_51 [0] : vector<8x512xf32> to vector<512xf32>
    %112 = vector.shape_cast %111 : vector<512xf32> to vector<1x512xf32>
    %cst_52 = arith.constant 1.250000e-01 : f32
    %113 = vector.broadcast %cst_52 : f32 to vector<1x512xf32>
    %114 = arith.mulf %112, %113 : vector<1x512xf32>
    %115 = arith.mulf %108, %108 : vector<8x512xf32>
    %cst_53 = arith.constant dense<0.000000e+00> : vector<512xf32>
    %116 = vector.multi_reduction <add>, %115, %cst_53 [0] : vector<8x512xf32> to vector<512xf32>
    %117 = vector.shape_cast %116 : vector<512xf32> to vector<1x512xf32>
    %cst_54 = arith.constant 1.250000e-01 : f32
    %118 = vector.broadcast %cst_54 : f32 to vector<1x512xf32>
    %119 = arith.mulf %117, %118 : vector<1x512xf32>
    %120 = arith.mulf %114, %114 : vector<1x512xf32>
    %121 = arith.subf %119, %120 : vector<1x512xf32>
    %122 = vector.broadcast %114 : vector<1x512xf32> to vector<8x512xf32>
    %123 = arith.subf %108, %122 : vector<8x512xf32>
    %cst_55 = arith.constant 8.000000e-01 : f32
    %124 = vector.broadcast %cst_55 : f32 to vector<1x512xf32>
    %125 = arith.addf %121, %124 : vector<1x512xf32>
    %126 = math.rsqrt %125 : vector<1x512xf32>
    %127 = vector.broadcast %126 : vector<1x512xf32> to vector<8x512xf32>
    %128 = arith.mulf %123, %127 : vector<8x512xf32>
    %129 = vector.broadcast %109 : vector<1x512xf32> to vector<8x512xf32>
    %130 = arith.mulf %128, %129 : vector<8x512xf32>
    %131 = vector.broadcast %110 : vector<1x512xf32> to vector<8x512xf32>
    %132 = arith.addf %130, %131 : vector<8x512xf32>
    %c0_56 = arith.constant 0 : index
    %c1024 = arith.constant 1024 : index
    %133 = vector.load %arg6[%c0_56, %c1024] : memref<1x1920xf32, #tpu.memory_space<vmem>>, vector<1x896xf32>
    %134 = arith.truncf %132 : vector<8x512xf32> to vector<8x512xbf16>
    %c0_57 = arith.constant 0 : index
    %c0_58 = arith.constant 0 : index
    %135 = vector.load %arg5[%c0_57, %c0_58] : memref<512x896xbf16, #tpu.memory_space<vmem>>, vector<512x896xbf16>
    %cst_59 = arith.constant dense<0.000000e+00> : vector<8x896xf32>
    %136 = tpu.matmul %134, %135, %cst_59 {dimension_numbers = #tpu.dot_dimension_numbers<[1], [0], [0], [1], [0, 0, 1, 1], [], []>} : vector<8x512xbf16>, vector<512x896xbf16>, vector<8x896xf32> -> vector<8x896xf32>
    %137 = vector.broadcast %133 : vector<1x896xf32> to vector<8x896xf32>
    %138 = arith.addf %136, %137 : vector<8x896xf32>
    %139 = math.tanh %138 : vector<8x896xf32>
    %c0_60 = arith.constant 0 : index
    %c0_61 = arith.constant 0 : index
    %140 = vector.load %arg8[%c0_60, %c0_61] : memref<8x896xf32, #tpu.memory_space<vmem>>, vector<8x896xf32>
    tpu.vector_store %arg8[%c0_60, %c0_61], %139 {strides = array<i32>} : memref<8x896xf32, #tpu.memory_space<vmem>>, vector<8x896xf32>,
    return
  }
}

</mosaic_0001>

<llo_original>
// kernel: tpu_custom_call.1
$region0: #{tpu_custom_call.1}
  #allocation0 [shape = 'u32[]', space=smem, size = 0x4, offset = 0x4, fixed_abs, tag = 'smem constant byte address 0x4 - core index']
  #allocation1 [shape = 'u32[72,128]{1,0:T(1,128)}', space=vmem, size = 0x9000, scoped, tag = 'internal scratch']
  %s0 = inlined_call_operand.hbm [shape: f32[8,50], index: 0, kind: input, shape index: {}]
  %s1 = inlined_call_operand.hbm [shape: bf16[50,64], index: 1, kind: input, shape index: {}]
  %s2 = inlined_call_operand.hbm [shape: bf16[64,128], index: 2, kind: input, shape index: {}]
  %s3 = inlined_call_operand.hbm [shape: bf16[128,256], index: 3, kind: input, shape index: {}]
  %s4 = inlined_call_operand.hbm [shape: bf16[256,512], index: 4, kind: input, shape index: {}]
  %s5 = inlined_call_operand.hbm [shape: bf16[512,896], index: 5, kind: input, shape index: {}]
  %s6 = inlined_call_operand.hbm [shape: f32[1,1920], index: 6, kind: input, shape index: {}]
  %s7 = inlined_call_operand.hbm [shape: f32[2,1024], index: 7, kind: input, shape index: {}]
  %s8 = inlined_call_operand.hbm [shape: f32[8,896], index: 8, kind: output, shape index: {}]
  %s9 = sld [smem:[#allocation0]]
  $region74: #{tpu_custom_call.1} parent=0
    _
  %s11 = ssub.s32 1, %s9
  %s12 = scalar_select 0, %s11, %s9
  $region1: #{tpu_custom_call.1} parent=0
    #allocation2 [shape = 'u8[4096]{0}', space=vmem, size = 0x1000, scoped, tag = 'input window, operand 0, single buffered']
    #allocation3 [shape = 's32[1]{0}', space=sflag, size = 0x4, scoped, tag = 'scoped memory for tpu_custom_call.1']
    #allocation4 [shape = 's32[1]{0}', space=sflag, size = 0x4, scoped, tag = 'scoped memory for tpu_custom_call.1']
    #allocation5 [shape = 'u8[14336]{0}', space=vmem, size = 0x3800, scoped, tag = 'input window, operand 1, single buffered']
    #allocation6 [shape = 's32[1]{0}', space=sflag, size = 0x4, scoped, tag = 'scoped memory for tpu_custom_call.1']
    #allocation7 [shape = 'u8[16384]{0}', space=vmem, size = 0x4000, scoped, tag = 'input window, operand 2, single buffered']
    #allocation8 [shape = 'u8[65536]{0}', space=vmem, size = 0x10000, scoped, tag = 'input window, operand 3, single buffered']
    #allocation9 [shape = 's32[1]{0}', space=sflag, size = 0x4, scoped, tag = 'scoped memory for tpu_custom_call.1']
    #allocation10 [shape = 'u8[262144]{0}', space=vmem, size = 0x40000, scoped, tag = 'input window, operand 4, single buffered']
    #allocation11 [shape = 'u8[917504]{0}', space=vmem, size = 0xe0000, scoped, tag = 'input window, operand 5, single buffered']
    #allocation12 [shape = 's32[1]{0}', space=sflag, size = 0x4, scoped, tag = 'scoped memory for tpu_custom_call.1']
    #allocation13 [shape = 'u8[7680]{0}', space=vmem, size = 0x2000, scoped, tag = 'input window, operand 6, single buffered']
    #allocation14 [shape = 'u8[8192]{0}', space=vmem, size = 0x2000, scoped, tag = 'input window, operand 7, single buffered']
    #allocation15 [shape = 's32[1]{0}', space=sflag, size = 0x4, scoped, tag = 'scoped memory for tpu_custom_call.1']
    #allocation16 [shape = 'u8[28672]{0}', space=vmem, size = 0x7000, scoped, tag = 'output window, operand 0, single buffered']
    %13 = vsyncpa [#allocation3], 0
    %14 = vsyncpa [#allocation6], 0
    %15 = vsyncpa [#allocation9], 0
    %16 = vsyncpa [#allocation12], 0
    %17 = vsyncpa [#allocation15], 0
    %18 = vsyncpa [#allocation4], 0
    // Predicated region
    $region2: #{tpu_custom_call.1} parent=1 // pred_check
      _
    $region3: #{tpu_custom_call.1} parent=1 // pred_check_branch
      %20 = sbr.rel (0) target = $region5
    $region4: #{tpu_custom_call.1} parent=1 // pred_region
      %22 = vsyncadd [#allocation3], 0
      %s24 = sshll.u32 %s0, 4
      %s25 = int_to_ptr.hbm [resolvable:$true] %s24
      %s26 = sshll.u32 [#allocation2], 4
      %s27 = int_to_ptr.vmem [resolvable:$true] %s26
      %29 = dma.hbm_to_vmem [thread:$0]  %s25, 128, %s27, [#allocation3]
    $region5: #{tpu_custom_call.1} parent=1 // pred_fallthru
      _
    // Predicated region
    $region6: #{tpu_custom_call.1} parent=1 // pred_check
      _
    $region7: #{tpu_custom_call.1} parent=1 // pred_check_branch
      %31 = sbr.rel (0) target = $region9
    $region8: #{tpu_custom_call.1} parent=1 // pred_region
      %33 = vsyncadd [#allocation6], 0
      %s34 = sshll.u32 %s1, 4
      %s35 = int_to_ptr.hbm [resolvable:$true] %s34
      %s36 = sshll.u32 [#allocation5], 4
      %s37 = int_to_ptr.vmem [resolvable:$true] %s36
      %42 = dma.hbm_to_vmem [thread:$0]  %s35, 448, %s37, [#allocation6], 64, 64, 4
    $region9: #{tpu_custom_call.1} parent=1 // pred_fallthru
      _
    // Predicated region
    $region10: #{tpu_custom_call.1} parent=1 // pred_check
      _
    $region11: #{tpu_custom_call.1} parent=1 // pred_check_branch
      %44 = sbr.rel (0) target = $region13
    $region12: #{tpu_custom_call.1} parent=1 // pred_region
      %46 = vsyncadd [#allocation6], 0
      %s47 = sshll.u32 %s2, 4
      %s48 = int_to_ptr.hbm [resolvable:$true] %s47
      %s49 = sshll.u32 [#allocation7], 4
      %s50 = int_to_ptr.vmem [resolvable:$true] %s49
      %55 = dma.hbm_to_vmem [thread:$0]  %s48, 512, %s50, [#allocation6], 64, 64, 4
    $region13: #{tpu_custom_call.1} parent=1 // pred_fallthru
      _
    // Predicated region
    $region14: #{tpu_custom_call.1} parent=1 // pred_check
      _
    $region15: #{tpu_custom_call.1} parent=1 // pred_check_branch
      %57 = sbr.rel (0) target = $region17
    $region16: #{tpu_custom_call.1} parent=1 // pred_region
      %59 = vsyncadd [#allocation9], 0
      %s60 = sshll.u32 %s3, 4
      %s61 = int_to_ptr.hbm [resolvable:$true] %s60
      %s62 = sshll.u32 [#allocation8], 4
      %s63 = int_to_ptr.vmem [resolvable:$true] %s62
      %68 = dma.hbm_to_vmem [thread:$0]  %s61, 2048, %s63, [#allocation9], 128, 128, 8
    $region17: #{tpu_custom_call.1} parent=1 // pred_fallthru
      _
    // Predicated region
    $region18: #{tpu_custom_call.1} parent=1 // pred_check
      _
    $region19: #{tpu_custom_call.1} parent=1 // pred_check_branch
      %70 = sbr.rel (0) target = $region21
    $region20: #{tpu_custom_call.1} parent=1 // pred_region
      %72 = vsyncadd [#allocation9], 0
      %s73 = sshll.u32 %s4, 4
      %s74 = int_to_ptr.hbm [resolvable:$true] %s73
      %s75 = sshll.u32 [#allocation10], 4
      %s76 = int_to_ptr.vmem [resolvable:$true] %s75
      %81 = dma.hbm_to_vmem [thread:$0]  %s74, 8192, %s76, [#allocation9], 256, 256, 16
    $region21: #{tpu_custom_call.1} parent=1 // pred_fallthru
      _
    // Predicated region
    $region22: #{tpu_custom_call.1} parent=1 // pred_check
      _
    $region23: #{tpu_custom_call.1} parent=1 // pred_check_branch
      %83 = sbr.rel (0) target = $region25
    $region24: #{tpu_custom_call.1} parent=1 // pred_region
      %85 = vsyncadd [#allocation12], 0
      %s86 = sshll.u32 %s5, 4
      %s87 = int_to_ptr.hbm [resolvable:$true] %s86
      %s88 = sshll.u32 [#allocation11], 4
      %s89 = int_to_ptr.vmem [resolvable:$true] %s88
      %94 = dma.hbm_to_vmem [thread:$0]  %s87, 28672, %s89, [#allocation12], 448, 448, 28
    $region25: #{tpu_custom_call.1} parent=1 // pred_fallthru
      _
    // Predicated region
    $region26: #{tpu_custom_call.1} parent=1 // pred_check
      _
    $region27: #{tpu_custom_call.1} parent=1 // pred_check_branch
      %96 = sbr.rel (0) target = $region29
    $region28: #{tpu_custom_call.1} parent=1 // pred_region
      %98 = vsyncadd [#allocation12], 0
      %s100 = sshll.u32 %s6, 4
      %s101 = int_to_ptr.hbm [resolvable:$true] %s100
      %s102 = sshll.u32 [#allocation13], 4
      %s103 = int_to_ptr.vmem [resolvable:$true] %s102
      %105 = dma.hbm_to_vmem [thread:$0]  %s101, 240, %s103, [#allocation12]
    $region29: #{tpu_custom_call.1} parent=1 // pred_fallthru
      _
    // Predicated region
    $region30: #{tpu_custom_call.1} parent=1 // pred_check
      _
    $region31: #{tpu_custom_call.1} parent=1 // pred_check_branch
      %107 = sbr.rel (0) target = $region33
    $region32: #{tpu_custom_call.1} parent=1 // pred_region
      %109 = vsyncadd [#allocation15], 0
      %s111 = sshll.u32 %s7, 4
      %s112 = int_to_ptr.hbm [resolvable:$true] %s111
      %s113 = sshll.u32 [#allocation14], 4
      %s114 = int_to_ptr.vmem [resolvable:$true] %s113
      %116 = dma.hbm_to_vmem [thread:$0]  %s112, 256, %s114, [#allocation15]
    $region33: #{tpu_custom_call.1} parent=1 // pred_fallthru
      _
    // Predicated region
    $region34: #{tpu_custom_call.1} parent=1 // pred_check
      _
    $region35: #{tpu_custom_call.1} parent=1 // pred_check_branch
      %118 = sbr.rel (0) target = $region37
    $region36: #{tpu_custom_call.1} parent=1 // pred_region
      %120 = dma.done [#allocation3], 128
    $region37: #{tpu_custom_call.1} parent=1 // pred_fallthru
      _
    // Predicated region
    $region38: #{tpu_custom_call.1} parent=1 // pred_check
      _
    $region39: #{tpu_custom_call.1} parent=1 // pred_check_branch
      %122 = sbr.rel (0) target = $region41
    $region40: #{tpu_custom_call.1} parent=1 // pred_region
      %124 = dma.done [#allocation6], 448
    $region41: #{tpu_custom_call.1} parent=1 // pred_fallthru
      _
    // Predicated region
    $region42: #{tpu_custom_call.1} parent=1 // pred_check
      _
    $region43: #{tpu_custom_call.1} parent=1 // pred_check_branch
      %126 = sbr.rel (0) target = $region45
    $region44: #{tpu_custom_call.1} parent=1 // pred_region
      %128 = dma.done [#allocation6], 512
    $region45: #{tpu_custom_call.1} parent=1 // pred_fallthru
      _
    // Predicated region
    $region46: #{tpu_custom_call.1} parent=1 // pred_check
      _
    $region47: #{tpu_custom_call.1} parent=1 // pred_check_branch
      %130 = sbr.rel (0) target = $region49
    $region48: #{tpu_custom_call.1} parent=1 // pred_region
      %132 = dma.done [#allocation9], 2048
    $region49: #{tpu_custom_call.1} parent=1 // pred_fallthru
      _
    // Predicated region
    $region50: #{tpu_custom_call.1} parent=1 // pred_check
      _
    $region51: #{tpu_custom_call.1} parent=1 // pred_check_branch
      %134 = sbr.rel (0) target = $region53
    $region52: #{tpu_custom_call.1} parent=1 // pred_region
      %136 = dma.done [#allocation9], 8192
    $region53: #{tpu_custom_call.1} parent=1 // pred_fallthru
      _
    // Predicated region
    $region54: #{tpu_custom_call.1} parent=1 // pred_check
      _
    $region55: #{tpu_custom_call.1} parent=1 // pred_check_branch
      %138 = sbr.rel (0) target = $region57
    $region56: #{tpu_custom_call.1} parent=1 // pred_region
      %140 = dma.done [#allocation12], 28672
    $region57: #{tpu_custom_call.1} parent=1 // pred_fallthru
      _
    // Predicated region
    $region58: #{tpu_custom_call.1} parent=1 // pred_check
      _
    $region59: #{tpu_custom_call.1} parent=1 // pred_check_branch
      %142 = sbr.rel (0) target = $region61
    $region60: #{tpu_custom_call.1} parent=1 // pred_region
      %144 = dma.done [#allocation12], 240
    $region61: #{tpu_custom_call.1} parent=1 // pred_fallthru
      _
    // Predicated region
    $region62: #{tpu_custom_call.1} parent=1 // pred_check
      _
    $region63: #{tpu_custom_call.1} parent=1 // pred_check_branch
      %146 = sbr.rel (0) target = $region65
    $region64: #{tpu_custom_call.1} parent=1 // pred_region
      %148 = dma.done [#allocation15], 256
    $region65: #{tpu_custom_call.1} parent=1 // pred_fallthru
      _
    %v150 = vld [vmem:[#allocation2] sm:$0xff]
    %v151 = vld [vmem:[#allocation13] sm:$0x1]
    %v152 = vpack.c.bf16 %v150, %v150
    %v153 = vld [vmem:[#allocation5] sm:$0xf]
    %v154 = vld [vmem:[#allocation5 + $0x4] sm:$0xf]
    %v155 = vld [vmem:[#allocation5 + $0x8] sm:$0xf]
    %v156 = vld [vmem:[#allocation5 + $0xc] sm:$0xf]
    %v157 = vld [vmem:[#allocation5 + $0x10] sm:$0xf]
    %v158 = vld [vmem:[#allocation5 + $0x14] sm:$0xf]
    %v159 = vld [vmem:[#allocation5 + $0x18] sm:$0x1]
    %v161 = vperm.slane %v151, 0
    %v170 = vunpack.c.l.b16 %v153
    %v171 = vunpack.c.l.b16 %v154
    %v172 = vunpack.c.l.b16 %v155
    %v173 = vunpack.c.l.b16 %v156
    %v174 = vunpack.c.l.b16 %v157
    %v175 = vunpack.c.l.b16 %v158
    %v176 = vunpack.c.l.b16 %v159
    %v177 = vpack.c.b16 %v171, %v170
    %v178 = vpack.c.b16 %v173, %v172
    %v179 = vpack.c.b16 %v175, %v174
    %v180 = vpack.c.b16 %v176, %v176
    %vm184 = vcmask 408576
    %v186 = vsel %vm184, %v152, 0
    %vm188 = vcmask 1040384
    %v190 = vsel %vm188, %v180, 0
    %192 = vmatpush.bf16.msra.mxu0 0
    %193 = vmatpush.bf16.msra.mxu0 0
    %194 = vmatpush.bf16.msra.mxu0 0
    %195 = vmatpush.bf16.msra.mxu0 0
    %196 = vmatpush.bf16.msra.mxu0 %v190
    %197 = vmatpush.bf16.msra.mxu0 %v179
    %198 = vmatpush.bf16.msra.mxu0 %v178
    %199 = vmatpush.bf16.msra.mxu0 %v177
    %200 = vmatmul.bf16.gmra.mxu0 %v186
    %v201 = vpop.f32.mrf.mxu0
    %v202 = vadd.f32 %v161, %v201
    %v203 = vpop.f32.mrf.mxu0
    %204 = vdwg.mxu0
    %v205 = vmul.f32 %v202, 0.2
    %v206 = vmax.f32 %v202, %v205
    %v207 = vld [vmem:[#allocation14] sm:$0x1]
    %v208 = vld [vmem:[#allocation14 + $0x1] sm:$0x1]
    %vm209 = vcmask 523264
    %v210 = vsel %vm209, %v206, 0.0
    %v211 = vrot.slane %v210, 4
    %v212 = vadd.f32 %v210, %v211
    %v213 = vrot.slane %v212, 2
    %v214 = vadd.f32 %v212, %v213
    %v215 = vrot.slane %v214, 1
    %v216 = vadd.f32 %v214, %v215
    %v217 = vmul.f32 %v216, 0.125
    %v218 = vmul.f32 %v206, %v206
    %v219 = vsel %vm209, %v218, 0.0
    %v220 = vrot.slane %v219, 4
    %v221 = vadd.f32 %v219, %v220
    %v222 = vrot.slane %v221, 2
    %v223 = vadd.f32 %v221, %v222
    %v224 = vrot.slane %v223, 1
    %v225 = vadd.f32 %v223, %v224
    %v226 = vmul.f32 %v225, 0.125
    %v227 = vmul.f32 %v217, %v217
    %v228 = vsub.f32 %v226, %v227
    %v229 = vsub.f32 %v206, %v217
    %v230 = vadd.f32 %v228, 0.8
    %v231 = vrsqrt.pop %v230
    %v232 = vmul.f32 %v231, %v230
    %v233 = vmul.f32 %v232, %v231
    %v234 = vmul.f32 0.5, %v233
    %v235 = vsub.f32 1.5, %v234
    %v236 = vmul.f32 %v231, %v235
    %vm237 = vweird.f32 %v230
    %vm238 = vweird.f32 %v231
    %vm239 = vmor %vm237, %vm238
    %v240 = vsel %vm239, %v231, %v236
    %v241 = vmul.f32 %v229, %v240
    %v242 = vperm.slane %v207, 0
    %v243 = vmul.f32 %v241, %v242
    %v244 = vperm.slane %v208, 0
    %v245 = vadd.f32 %v243, %v244
    %v246 = vld [vmem:[#allocation13 + $0x1] sm:$0x1]
    %v247 = vpack.c.bf16 %v245, %v245
    %v248 = vld [vmem:[#allocation7] sm:$0xf]
    %v249 = vld [vmem:[#allocation7 + $0x4] sm:$0xf]
    %v250 = vld [vmem:[#allocation7 + $0x8] sm:$0xf]
    %v251 = vld [vmem:[#allocation7 + $0xc] sm:$0xf]
    %v252 = vld [vmem:[#allocation7 + $0x10] sm:$0xf]
    %v253 = vld [vmem:[#allocation7 + $0x14] sm:$0xf]
    %v254 = vld [vmem:[#allocation7 + $0x18] sm:$0xf]
    %v255 = vld [vmem:[#allocation7 + $0x1c] sm:$0xf]
    %v257 = vperm.slane %v246, 0
    %v267 = vunpack.c.l.b16 %v248
    %v268 = vunpack.c.l.b16 %v249
    %v269 = vunpack.c.l.b16 %v250
    %v270 = vunpack.c.l.b16 %v251
    %v271 = vunpack.c.l.b16 %v252
    %v272 = vunpack.c.l.b16 %v253
    %v273 = vunpack.c.l.b16 %v254
    %v274 = vunpack.c.l.b16 %v255
    %v275 = vpack.c.b16 %v268, %v267
    %v276 = vpack.c.b16 %v270, %v269
    %v277 = vpack.c.b16 %v272, %v271
    %v278 = vpack.c.b16 %v274, %v273
    %v284 = vsel %vm209, %v247, 0
    %286 = vmatpush.bf16.msra.mxu0 0
    %287 = vmatpush.bf16.msra.mxu0 0
    %288 = vmatpush.bf16.msra.mxu0 0
    %289 = vmatpush.bf16.msra.mxu0 0
    %290 = vmatpush.bf16.msra.mxu0 %v278
    %291 = vmatpush.bf16.msra.mxu0 %v277
    %292 = vmatpush.bf16.msra.mxu0 %v276
    %293 = vmatpush.bf16.msra.mxu0 %v275
    %294 = vmatmul.bf16.gmra.mxu0 %v284
    %v295 = vpop.f32.mrf.mxu0
    %v296 = vadd.f32 %v257, %v295
    %v297 = vpop.f32.mrf.mxu0
    %298 = vdwg.mxu0
    %v299 = vmul.f32 %v296, 0.2
    %v300 = vmax.f32 %v296, %v299
    %v301 = vld [vmem:[#allocation14 + $0x2] sm:$0x1]
    %v302 = vld [vmem:[#allocation14 + $0x3] sm:$0x1]
    %v303 = vrot.slane %v300, 4
    %v304 = vadd.f32 %v300, %v303
    %v305 = vrot.slane %v304, 2
    %v306 = vadd.f32 %v304, %v305
    %v307 = vrot.slane %v306, 1
    %v308 = vadd.f32 %v306, %v307
    %v309 = vmul.f32 %v308, 0.125
    %v310 = vmul.f32 %v300, %v300
    %v311 = vrot.slane %v310, 4
    %v312 = vadd.f32 %v310, %v311
    %v313 = vrot.slane %v312, 2
    %v314 = vadd.f32 %v312, %v313
    %v315 = vrot.slane %v314, 1
    %v316 = vadd.f32 %v314, %v315
    %v317 = vmul.f32 %v316, 0.125
    %v318 = vmul.f32 %v309, %v309
    %v319 = vsub.f32 %v317, %v318
    %v320 = vsub.f32 %v300, %v309
    %v321 = vadd.f32 %v319, 0.8
    %v322 = vrsqrt.pop %v321
    %v323 = vmul.f32 %v322, %v321
    %v324 = vmul.f32 %v323, %v322
    %v325 = vmul.f32 0.5, %v324
    %v326 = vsub.f32 1.5, %v325
    %v327 = vmul.f32 %v322, %v326
    %vm328 = vweird.f32 %v321
    %vm329 = vweird.f32 %v322
    %vm330 = vmor %vm328, %vm329
    %v331 = vsel %vm330, %v322, %v327
    %v332 = vmul.f32 %v320, %v331
    %v333 = vperm.slane %v301, 0
    %v334 = vmul.f32 %v332, %v333
    %v335 = vperm.slane %v302, 0
    %v336 = vadd.f32 %v334, %v335
    %v337 = vld [vmem:[#allocation13 + $0x2] sm:$0x3]
    %v338 = vpack.c.bf16 %v336, %v336
    %v339 = vld [vmem:[#allocation8] sm:$0xff]
    %v340 = vld [vmem:[#allocation8 + $0x8] sm:$0xff]
    %v341 = vld [vmem:[#allocation8 + $0x10] sm:$0xff]
    %v342 = vld [vmem:[#allocation8 + $0x18] sm:$0xff]
    %v343 = vld [vmem:[#allocation8 + $0x20] sm:$0xff]
    %v344 = vld [vmem:[#allocation8 + $0x28] sm:$0xff]
    %v345 = vld [vmem:[#allocation8 + $0x30] sm:$0xff]
    %v346 = vld [vmem:[#allocation8 + $0x38] sm:$0xff]
    %v347 = vld [vmem:[#allocation8 + $0x40] sm:$0xff]
    %v348 = vld [vmem:[#allocation8 + $0x48] sm:$0xff]
    %v349 = vld [vmem:[#allocation8 + $0x50] sm:$0xff]
    %v350 = vld [vmem:[#allocation8 + $0x58] sm:$0xff]
    %v351 = vld [vmem:[#allocation8 + $0x60] sm:$0xff]
    %v352 = vld [vmem:[#allocation8 + $0x68] sm:$0xff]
    %v353 = vld [vmem:[#allocation8 + $0x70] sm:$0xff]
    %v354 = vld [vmem:[#allocation8 + $0x78] sm:$0xff]
    %v356 = vperm.slane %v337, 0
    %v357 = vperm.slane %v337, 1
    %v376 = vunpack.c.l.b16 %v339
    %v377 = vunpack.c.h.b16 %v339
    %v378 = vunpack.c.l.b16 %v340
    %v379 = vunpack.c.h.b16 %v340
    %v380 = vunpack.c.l.b16 %v341
    %v381 = vunpack.c.h.b16 %v341
    %v382 = vunpack.c.l.b16 %v342
    %v383 = vunpack.c.h.b16 %v342
    %v384 = vunpack.c.l.b16 %v343
    %v385 = vunpack.c.h.b16 %v343
    %v386 = vunpack.c.l.b16 %v344
    %v387 = vunpack.c.h.b16 %v344
    %v388 = vunpack.c.l.b16 %v345
    %v389 = vunpack.c.h.b16 %v345
    %v390 = vunpack.c.l.b16 %v346
    %v391 = vunpack.c.h.b16 %v346
    %v392 = vunpack.c.l.b16 %v347
    %v393 = vunpack.c.h.b16 %v347
    %v394 = vunpack.c.l.b16 %v348
    %v395 = vunpack.c.h.b16 %v348
    %v396 = vunpack.c.l.b16 %v349
    %v397 = vunpack.c.h.b16 %v349
    %v398 = vunpack.c.l.b16 %v350
    %v399 = vunpack.c.h.b16 %v350
    %v400 = vunpack.c.l.b16 %v351
    %v401 = vunpack.c.h.b16 %v351
    %v402 = vunpack.c.l.b16 %v352
    %v403 = vunpack.c.h.b16 %v352
    %v404 = vunpack.c.l.b16 %v353
    %v405 = vunpack.c.h.b16 %v353
    %v406 = vunpack.c.l.b16 %v354
    %v407 = vunpack.c.h.b16 %v354
    %v408 = vpack.c.b16 %v378, %v376
    %v409 = vpack.c.b16 %v379, %v377
    %v410 = vpack.c.b16 %v382, %v380
    %v411 = vpack.c.b16 %v383, %v381
    %v412 = vpack.c.b16 %v386, %v384
    %v413 = vpack.c.b16 %v387, %v385
    %v414 = vpack.c.b16 %v390, %v388
    %v415 = vpack.c.b16 %v391, %v389
    %v416 = vpack.c.b16 %v394, %v392
    %v417 = vpack.c.b16 %v395, %v393
    %v418 = vpack.c.b16 %v398, %v396
    %v419 = vpack.c.b16 %v399, %v397
    %v420 = vpack.c.b16 %v402, %v400
    %v421 = vpack.c.b16 %v403, %v401
    %v422 = vpack.c.b16 %v406, %v404
    %v423 = vpack.c.b16 %v407, %v405
    %440 = vmatpush.bf16.msra.mxu0 %v422
    %441 = vmatpush.bf16.msra.mxu0 %v420
    %442 = vmatpush.bf16.msra.mxu0 %v418
    %443 = vmatpush.bf16.msra.mxu0 %v416
    %444 = vmatpush.bf16.msra.mxu0 %v414
    %445 = vmatpush.bf16.msra.mxu0 %v412
    %446 = vmatpush.bf16.msra.mxu0 %v410
    %447 = vmatpush.bf16.msra.mxu0 %v408
    %448 = vmatmul.bf16.gmra.mxu0 %v338
    %v449 = vpop.f32.mrf.mxu0
    %v450 = vadd.f32 %v356, %v449
    %v451 = vpop.f32.mrf.mxu0
    %452 = vdwg.mxu0
    %453 = vmatpush.bf16.msra.mxu0 %v423
    %454 = vmatpush.bf16.msra.mxu0 %v421
    %455 = vmatpush.bf16.msra.mxu0 %v419
    %456 = vmatpush.bf16.msra.mxu0 %v417
    %457 = vmatpush.bf16.msra.mxu0 %v415
    %458 = vmatpush.bf16.msra.mxu0 %v413
    %459 = vmatpush.bf16.msra.mxu0 %v411
    %460 = vmatpush.bf16.msra.mxu0 %v409
    %461 = vmatmul.bf16.gmra.mxu0 %v338
    %v462 = vpop.f32.mrf.mxu0
    %v463 = vadd.f32 %v357, %v462
    %v464 = vpop.f32.mrf.mxu0
    %465 = vdwg.mxu0
    %v466 = vmul.f32 %v450, 0.2
    %v467 = vmul.f32 %v463, 0.2
    %v468 = vmax.f32 %v450, %v466
    %v469 = vmax.f32 %v463, %v467
    %s470 = scalar_lea.vmem [#allocation14], 4
    %v471 = vld [vmem:[%s470] ss:$2 sm:$0x3]
    %s472 = scalar_lea.vmem [#allocation14], 5
    %v473 = vld [vmem:[%s472] ss:$2 sm:$0x3]
    %v474 = vrot.slane %v468, 4
    %v475 = vadd.f32 %v468, %v474
    %v476 = vrot.slane %v475, 2
    %v477 = vadd.f32 %v475, %v476
    %v478 = vrot.slane %v477, 1
    %v479 = vadd.f32 %v477, %v478
    %v480 = vrot.slane %v469, 4
    %v481 = vadd.f32 %v469, %v480
    %v482 = vrot.slane %v481, 2
    %v483 = vadd.f32 %v481, %v482
    %v484 = vrot.slane %v483, 1
    %v485 = vadd.f32 %v483, %v484
    %v486 = vmul.f32 %v479, 0.125
    %v487 = vmul.f32 %v485, 0.125
    %v488 = vmul.f32 %v468, %v468
    %v489 = vmul.f32 %v469, %v469
    %v490 = vrot.slane %v488, 4
    %v491 = vadd.f32 %v488, %v490
    %v492 = vrot.slane %v491, 2
    %v493 = vadd.f32 %v491, %v492
    %v494 = vrot.slane %v493, 1
    %v495 = vadd.f32 %v493, %v494
    %v496 = vrot.slane %v489, 4
    %v497 = vadd.f32 %v489, %v496
    %v498 = vrot.slane %v497, 2
    %v499 = vadd.f32 %v497, %v498
    %v500 = vrot.slane %v499, 1
    %v501 = vadd.f32 %v499, %v500
    %v502 = vmul.f32 %v495, 0.125
    %v503 = vmul.f32 %v501, 0.125
    %v504 = vmul.f32 %v486, %v486
    %v505 = vmul.f32 %v487, %v487
    %v506 = vsub.f32 %v502, %v504
    %v507 = vsub.f32 %v503, %v505
    %v508 = vsub.f32 %v468, %v486
    %v509 = vsub.f32 %v469, %v487
    %v510 = vadd.f32 %v506, 0.8
    %v511 = vadd.f32 %v507, 0.8
    %v512 = vrsqrt.pop %v510
    %v513 = vmul.f32 %v512, %v510
    %v514 = vmul.f32 %v513, %v512
    %v515 = vmul.f32 0.5, %v514
    %v516 = vsub.f32 1.5, %v515
    %v517 = vmul.f32 %v512, %v516
    %vm518 = vweird.f32 %v510
    %vm519 = vweird.f32 %v512
    %vm520 = vmor %vm518, %vm519
    %v521 = vsel %vm520, %v512, %v517
    %v522 = vrsqrt.pop %v511
    %v523 = vmul.f32 %v522, %v511
    %v524 = vmul.f32 %v523, %v522
    %v525 = vmul.f32 0.5, %v524
    %v526 = vsub.f32 1.5, %v525
    %v527 = vmul.f32 %v522, %v526
    %vm528 = vweird.f32 %v511
    %vm529 = vweird.f32 %v522
    %vm530 = vmor %vm528, %vm529
    %v531 = vsel %vm530, %v522, %v527
    %v532 = vmul.f32 %v508, %v521
    %v533 = vmul.f32 %v509, %v531
    %v535 = vperm.slane %v471, 0
    %v536 = vperm.slane %v471, 1
    %v539 = vmul.f32 %v532, %v535
    %v540 = vmul.f32 %v533, %v536
    %v542 = vperm.slane %v473, 0
    %v543 = vperm.slane %v473, 1
    %v546 = vadd.f32 %v539, %v542
    %v547 = vadd.f32 %v540, %v543
    %v548 = vld [vmem:[#allocation13 + $0x4] sm:$0xf]
    %v549 = vpack.c.bf16 %v546, %v546
    %v550 = vpack.c.bf16 %v547, %v547
    %v551 = vld [vmem:[#allocation10] sm:$0xff]
    %v552 = vld [vmem:[#allocation10 + $0x8] sm:$0xff]
    %v553 = vld [vmem:[#allocation10 + $0x10] sm:$0xff]
    %v554 = vld [vmem:[#allocation10 + $0x18] sm:$0xff]
    %v555 = vld [vmem:[#allocation10 + $0x20] sm:$0xff]
    %v556 = vld [vmem:[#allocation10 + $0x28] sm:$0xff]
    %v557 = vld [vmem:[#allocation10 + $0x30] sm:$0xff]
    %v558 = vld [vmem:[#allocation10 + $0x38] sm:$0xff]
    %v559 = vld [vmem:[#allocation10 + $0x40] sm:$0xff]
    %v560 = vld [vmem:[#allocation10 + $0x48] sm:$0xff]
    %v561 = vld [vmem:[#allocation10 + $0x50] sm:$0xff]
    %v562 = vld [vmem:[#allocation10 + $0x58] sm:$0xff]
    %v563 = vld [vmem:[#allocation10 + $0x60] sm:$0xff]
    %v564 = vld [vmem:[#allocation10 + $0x68] sm:$0xff]
    %v565 = vld [vmem:[#allocation10 + $0x70] sm:$0xff]
    %v566 = vld [vmem:[#allocation10 + $0x78] sm:$0xff]
    %v567 = vld [vmem:[#allocation10 + $0x80] sm:$0xff]
    %v568 = vld [vmem:[#allocation10 + $0x88] sm:$0xff]
    %v569 = vld [vmem:[#allocation10 + $0x90] sm:$0xff]
    %v570 = vld [vmem:[#allocation10 + $0x98] sm:$0xff]
    %v571 = vld [vmem:[#allocation10 + $0xa0] sm:$0xff]
    %v572 = vld [vmem:[#allocation10 + $0xa8] sm:$0xff]
    %v573 = vld [vmem:[#allocation10 + $0xb0] sm:$0xff]
    %v574 = vld [vmem:[#allocation10 + $0xb8] sm:$0xff]
    %v575 = vld [vmem:[#allocation10 + $0xc0] sm:$0xff]
    %v576 = vld [vmem:[#allocation10 + $0xc8] sm:$0xff]
    %v577 = vld [vmem:[#allocation10 + $0xd0] sm:$0xff]
    %v578 = vld [vmem:[#allocation10 + $0xd8] sm:$0xff]
    %v579 = vld [vmem:[#allocation10 + $0xe0] sm:$0xff]
    %v580 = vld [vmem:[#allocation10 + $0xe8] sm:$0xff]
    %v581 = vld [vmem:[#allocation10 + $0xf0] sm:$0xff]
    %v582 = vld [vmem:[#allocation10 + $0xf8] sm:$0xff]
    %v583 = vld [vmem:[#allocation10 + $0x100] sm:$0xff]
    %v584 = vld [vmem:[#allocation10 + $0x108] sm:$0xff]
    %v585 = vld [vmem:[#allocation10 + $0x110] sm:$0xff]
    %v586 = vld [vmem:[#allocation10 + $0x118] sm:$0xff]
    %v587 = vld [vmem:[#allocation10 + $0x120] sm:$0xff]
    %v588 = vld [vmem:[#allocation10 + $0x128] sm:$0xff]
    %v589 = vld [vmem:[#allocation10 + $0x130] sm:$0xff]
    %v590 = vld [vmem:[#allocation10 + $0x138] sm:$0xff]
    %v591 = vld [vmem:[#allocation10 + $0x140] sm:$0xff]
    %v592 = vld [vmem:[#allocation10 + $0x148] sm:$0xff]
    %v593 = vld [vmem:[#allocation10 + $0x150] sm:$0xff]
    %v594 = vld [vmem:[#allocation10 + $0x158] sm:$0xff]
    %v595 = vld [vmem:[#allocation10 + $0x160] sm:$0xff]
    %v596 = vld [vmem:[#allocation10 + $0x168] sm:$0xff]
    %v597 = vld [vmem:[#allocation10 + $0x170] sm:$0xff]
    %v598 = vld [vmem:[#allocation10 + $0x178] sm:$0xff]
    %v599 = vld [vmem:[#allocation10 + $0x180] sm:$0xff]
    %v600 = vld [vmem:[#allocation10 + $0x188] sm:$0xff]
    %v601 = vld [vmem:[#allocation10 + $0x190] sm:$0xff]
    %v602 = vld [vmem:[#allocation10 + $0x198] sm:$0xff]
    %v603 = vld [vmem:[#allocation10 + $0x1a0] sm:$0xff]
    %v604 = vld [vmem:[#allocation10 + $0x1a8] sm:$0xff]
    %v605 = vld [vmem:[#allocation10 + $0x1b0] sm:$0xff]
    %v606 = vld [vmem:[#allocation10 + $0x1b8] sm:$0xff]
    %v607 = vld [vmem:[#allocation10 + $0x1c0] sm:$0xff]
    %v608 = vld [vmem:[#allocation10 + $0x1c8] sm:$0xff]
    %v609 = vld [vmem:[#allocation10 + $0x1d0] sm:$0xff]
    %v610 = vld [vmem:[#allocation10 + $0x1d8] sm:$0xff]
    %v611 = vld [vmem:[#allocation10 + $0x1e0] sm:$0xff]
    %v612 = vld [vmem:[#allocation10 + $0x1e8] sm:$0xff]
    %v613 = vld [vmem:[#allocation10 + $0x1f0] sm:$0xff]
    %v614 = vld [vmem:[#allocation10 + $0x1f8] sm:$0xff]
    %v616 = vperm.slane %v548, 0
    %v617 = vperm.slane %v548, 1
    %v618 = vperm.slane %v548, 2
    %v619 = vperm.slane %v548, 3
    %v688 = vunpack.c.l.b16 %v551
    %v689 = vunpack.c.h.b16 %v551
    %v690 = vunpack.c.l.b16 %v552
    %v691 = vunpack.c.h.b16 %v552
    %v692 = vunpack.c.l.b16 %v553
    %v693 = vunpack.c.h.b16 %v553
    %v694 = vunpack.c.l.b16 %v554
    %v695 = vunpack.c.h.b16 %v554
    %v696 = vunpack.c.l.b16 %v555
    %v697 = vunpack.c.h.b16 %v555
    %v698 = vunpack.c.l.b16 %v556
    %v699 = vunpack.c.h.b16 %v556
    %v700 = vunpack.c.l.b16 %v557
    %v701 = vunpack.c.h.b16 %v557
    %v702 = vunpack.c.l.b16 %v558
    %v703 = vunpack.c.h.b16 %v558
    %v704 = vunpack.c.l.b16 %v559
    %v705 = vunpack.c.h.b16 %v559
    %v706 = vunpack.c.l.b16 %v560
    %v707 = vunpack.c.h.b16 %v560
    %v708 = vunpack.c.l.b16 %v561
    %v709 = vunpack.c.h.b16 %v561
    %v710 = vunpack.c.l.b16 %v562
    %v711 = vunpack.c.h.b16 %v562
    %v712 = vunpack.c.l.b16 %v563
    %v713 = vunpack.c.h.b16 %v563
    %v714 = vunpack.c.l.b16 %v564
    %v715 = vunpack.c.h.b16 %v564
    %v716 = vunpack.c.l.b16 %v565
    %v717 = vunpack.c.h.b16 %v565
    %v718 = vunpack.c.l.b16 %v566
    %v719 = vunpack.c.h.b16 %v566
    %v720 = vunpack.c.l.b16 %v567
    %v721 = vunpack.c.h.b16 %v567
    %v722 = vunpack.c.l.b16 %v568
    %v723 = vunpack.c.h.b16 %v568
    %v724 = vunpack.c.l.b16 %v569
    %v725 = vunpack.c.h.b16 %v569
    %v726 = vunpack.c.l.b16 %v570
    %v727 = vunpack.c.h.b16 %v570
    %v728 = vunpack.c.l.b16 %v571
    %v729 = vunpack.c.h.b16 %v571
    %v730 = vunpack.c.l.b16 %v572
    %v731 = vunpack.c.h.b16 %v572
    %v732 = vunpack.c.l.b16 %v573
    %v733 = vunpack.c.h.b16 %v573
    %v734 = vunpack.c.l.b16 %v574
    %v735 = vunpack.c.h.b16 %v574
    %v736 = vunpack.c.l.b16 %v575
    %v737 = vunpack.c.h.b16 %v575
    %v738 = vunpack.c.l.b16 %v576
    %v739 = vunpack.c.h.b16 %v576
    %v740 = vunpack.c.l.b16 %v577
    %v741 = vunpack.c.h.b16 %v577
    %v742 = vunpack.c.l.b16 %v578
    %v743 = vunpack.c.h.b16 %v578
    %v744 = vunpack.c.l.b16 %v579
    %v745 = vunpack.c.h.b16 %v579
    %v746 = vunpack.c.l.b16 %v580
    %v747 = vunpack.c.h.b16 %v580
    %v748 = vunpack.c.l.b16 %v581
    %v749 = vunpack.c.h.b16 %v581
    %v750 = vunpack.c.l.b16 %v582
    %v751 = vunpack.c.h.b16 %v582
    %v752 = vunpack.c.l.b16 %v583
    %v753 = vunpack.c.h.b16 %v583
    %v754 = vunpack.c.l.b16 %v584
    %v755 = vunpack.c.h.b16 %v584
    %v756 = vunpack.c.l.b16 %v585
    %v757 = vunpack.c.h.b16 %v585
    %v758 = vunpack.c.l.b16 %v586
    %v759 = vunpack.c.h.b16 %v586
    %v760 = vunpack.c.l.b16 %v587
    %v761 = vunpack.c.h.b16 %v587
    %v762 = vunpack.c.l.b16 %v588
    %v763 = vunpack.c.h.b16 %v588
    %v764 = vunpack.c.l.b16 %v589
    %v765 = vunpack.c.h.b16 %v589
    %v766 = vunpack.c.l.b16 %v590
    %v767 = vunpack.c.h.b16 %v590
    %v768 = vunpack.c.l.b16 %v591
    %v769 = vunpack.c.h.b16 %v591
    %v770 = vunpack.c.l.b16 %v592
    %v771 = vunpack.c.h.b16 %v592
    %v772 = vunpack.c.l.b16 %v593
    %v773 = vunpack.c.h.b16 %v593
    %v774 = vunpack.c.l.b16 %v594
    %v775 = vunpack.c.h.b16 %v594
    %v776 = vunpack.c.l.b16 %v595
    %v777 = vunpack.c.h.b16 %v595
    %v778 = vunpack.c.l.b16 %v596
    %v779 = vunpack.c.h.b16 %v596
    %v780 = vunpack.c.l.b16 %v597
    %v781 = vunpack.c.h.b16 %v597
    %v782 = vunpack.c.l.b16 %v598
    %v783 = vunpack.c.h.b16 %v598
    %v784 = vunpack.c.l.b16 %v599
    %v785 = vunpack.c.h.b16 %v599
    %v786 = vunpack.c.l.b16 %v600
    %v787 = vunpack.c.h.b16 %v600
    %v788 = vunpack.c.l.b16 %v601
    %v789 = vunpack.c.h.b16 %v601
    %v790 = vunpack.c.l.b16 %v602
    %v791 = vunpack.c.h.b16 %v602
    %v792 = vunpack.c.l.b16 %v603
    %v793 = vunpack.c.h.b16 %v603
    %v794 = vunpack.c.l.b16 %v604
    %v795 = vunpack.c.h.b16 %v604
    %v796 = vunpack.c.l.b16 %v605
    %v797 = vunpack.c.h.b16 %v605
    %v798 = vunpack.c.l.b16 %v606
    %v799 = vunpack.c.h.b16 %v606
    %v800 = vunpack.c.l.b16 %v607
    %v801 = vunpack.c.h.b16 %v607
    %v802 = vunpack.c.l.b16 %v608
    %v803 = vunpack.c.h.b16 %v608
    %v804 = vunpack.c.l.b16 %v609
    %v805 = vunpack.c.h.b16 %v609
    %v806 = vunpack.c.l.b16 %v610
    %v807 = vunpack.c.h.b16 %v610
    %v808 = vunpack.c.l.b16 %v611
    %v809 = vunpack.c.h.b16 %v611
    %v810 = vunpack.c.l.b16 %v612
    %v811 = vunpack.c.h.b16 %v612
    %v812 = vunpack.c.l.b16 %v613
    %v813 = vunpack.c.h.b16 %v613
    %v814 = vunpack.c.l.b16 %v614
    %v815 = vunpack.c.h.b16 %v614
    %v816 = vpack.c.b16 %v692, %v688
    %v817 = vpack.c.b16 %v693, %v689
    %v818 = vpack.c.b16 %v694, %v690
    %v819 = vpack.c.b16 %v695, %v691
    %v820 = vpack.c.b16 %v700, %v696
    %v821 = vpack.c.b16 %v701, %v697
    %v822 = vpack.c.b16 %v702, %v698
    %v823 = vpack.c.b16 %v703, %v699
    %v824 = vpack.c.b16 %v708, %v704
    %v825 = vpack.c.b16 %v709, %v705
    %v826 = vpack.c.b16 %v710, %v706
    %v827 = vpack.c.b16 %v711, %v707
    %v828 = vpack.c.b16 %v716, %v712
    %v829 = vpack.c.b16 %v717, %v713
    %v830 = vpack.c.b16 %v718, %v714
    %v831 = vpack.c.b16 %v719, %v715
    %v832 = vpack.c.b16 %v724, %v720
    %v833 = vpack.c.b16 %v725, %v721
    %v834 = vpack.c.b16 %v726, %v722
    %v835 = vpack.c.b16 %v727, %v723
    %v836 = vpack.c.b16 %v732, %v728
    %v837 = vpack.c.b16 %v733, %v729
    %v838 = vpack.c.b16 %v734, %v730
    %v839 = vpack.c.b16 %v735, %v731
    %v840 = vpack.c.b16 %v740, %v736
    %v841 = vpack.c.b16 %v741, %v737
    %v842 = vpack.c.b16 %v742, %v738
    %v843 = vpack.c.b16 %v743, %v739
    %v844 = vpack.c.b16 %v748, %v744
    %v845 = vpack.c.b16 %v749, %v745
    %v846 = vpack.c.b16 %v750, %v746
    %v847 = vpack.c.b16 %v751, %v747
    %v848 = vpack.c.b16 %v756, %v752
    %v849 = vpack.c.b16 %v757, %v753
    %v850 = vpack.c.b16 %v758, %v754
    %v851 = vpack.c.b16 %v759, %v755
    %v852 = vpack.c.b16 %v764, %v760
    %v853 = vpack.c.b16 %v765, %v761
    %v854 = vpack.c.b16 %v766, %v762
    %v855 = vpack.c.b16 %v767, %v763
    %v856 = vpack.c.b16 %v772, %v768
    %v857 = vpack.c.b16 %v773, %v769
    %v858 = vpack.c.b16 %v774, %v770
    %v859 = vpack.c.b16 %v775, %v771
    %v860 = vpack.c.b16 %v780, %v776
    %v861 = vpack.c.b16 %v781, %v777
    %v862 = vpack.c.b16 %v782, %v778
    %v863 = vpack.c.b16 %v783, %v779
    %v864 = vpack.c.b16 %v788, %v784
    %v865 = vpack.c.b16 %v789, %v785
    %v866 = vpack.c.b16 %v790, %v786
    %v867 = vpack.c.b16 %v791, %v787
    %v868 = vpack.c.b16 %v796, %v792
    %v869 = vpack.c.b16 %v797, %v793
    %v870 = vpack.c.b16 %v798, %v794
    %v871 = vpack.c.b16 %v799, %v795
    %v872 = vpack.c.b16 %v804, %v800
    %v873 = vpack.c.b16 %v805, %v801
    %v874 = vpack.c.b16 %v806, %v802
    %v875 = vpack.c.b16 %v807, %v803
    %v876 = vpack.c.b16 %v812, %v808
    %v877 = vpack.c.b16 %v813, %v809
    %v878 = vpack.c.b16 %v814, %v810
    %v879 = vpack.c.b16 %v815, %v811
    %944 = vmatpush.bf16.msra.mxu0 %v844
    %945 = vmatpush.bf16.msra.mxu0 %v840
    %946 = vmatpush.bf16.msra.mxu0 %v836
    %947 = vmatpush.bf16.msra.mxu0 %v832
    %948 = vmatpush.bf16.msra.mxu0 %v828
    %949 = vmatpush.bf16.msra.mxu0 %v824
    %950 = vmatpush.bf16.msra.mxu0 %v820
    %951 = vmatpush.bf16.msra.mxu0 %v816
    %952 = vmatmul.bf16.gmra.mxu0 %v549
    %v953 = vpop.f32.mrf.mxu0
    %v954 = vadd.f32 %v616, %v953
    %v955 = vpop.f32.mrf.mxu0
    %956 = vdwg.mxu0
    %957 = vmatpush.bf16.msra.mxu0 %v876
    %958 = vmatpush.bf16.msra.mxu0 %v872
    %959 = vmatpush.bf16.msra.mxu0 %v868
    %960 = vmatpush.bf16.msra.mxu0 %v864
    %961 = vmatpush.bf16.msra.mxu0 %v860
    %962 = vmatpush.bf16.msra.mxu0 %v856
    %963 = vmatpush.bf16.msra.mxu0 %v852
    %964 = vmatpush.bf16.msra.mxu0 %v848
    %965 = vmatmul.bf16.gmra.mxu0 %v550
    %v966 = vpop.f32.mrf.mxu0
    %v967 = vadd.f32 %v954, %v966
    %v968 = vpop.f32.mrf.mxu0
    %969 = vdwg.mxu0
    %970 = vmatpush.bf16.msra.mxu0 %v845
    %971 = vmatpush.bf16.msra.mxu0 %v841
    %972 = vmatpush.bf16.msra.mxu0 %v837
    %973 = vmatpush.bf16.msra.mxu0 %v833
    %974 = vmatpush.bf16.msra.mxu0 %v829
    %975 = vmatpush.bf16.msra.mxu0 %v825
    %976 = vmatpush.bf16.msra.mxu0 %v821
    %977 = vmatpush.bf16.msra.mxu0 %v817
    %978 = vmatmul.bf16.gmra.mxu0 %v549
    %v979 = vpop.f32.mrf.mxu0
    %v980 = vadd.f32 %v617, %v979
    %v981 = vpop.f32.mrf.mxu0
    %982 = vdwg.mxu0
    %983 = vmatpush.bf16.msra.mxu0 %v877
    %984 = vmatpush.bf16.msra.mxu0 %v873
    %985 = vmatpush.bf16.msra.mxu0 %v869
    %986 = vmatpush.bf16.msra.mxu0 %v865
    %987 = vmatpush.bf16.msra.mxu0 %v861
    %988 = vmatpush.bf16.msra.mxu0 %v857
    %989 = vmatpush.bf16.msra.mxu0 %v853
    %990 = vmatpush.bf16.msra.mxu0 %v849
    %991 = vmatmul.bf16.gmra.mxu0 %v550
    %v992 = vpop.f32.mrf.mxu0
    %v993 = vadd.f32 %v980, %v992
    %v994 = vpop.f32.mrf.mxu0
    %995 = vdwg.mxu0
    %996 = vmatpush.bf16.msra.mxu0 %v846
    %997 = vmatpush.bf16.msra.mxu0 %v842
    %998 = vmatpush.bf16.msra.mxu0 %v838
    %999 = vmatpush.bf16.msra.mxu0 %v834
    %1000 = vmatpush.bf16.msra.mxu0 %v830
    %1001 = vmatpush.bf16.msra.mxu0 %v826
    %1002 = vmatpush.bf16.msra.mxu0 %v822
    %1003 = vmatpush.bf16.msra.mxu0 %v818
    %1004 = vmatmul.bf16.gmra.mxu0 %v549
    %v1005 = vpop.f32.mrf.mxu0
    %v1006 = vadd.f32 %v618, %v1005
    %v1007 = vpop.f32.mrf.mxu0
    %1008 = vdwg.mxu0
    %1009 = vmatpush.bf16.msra.mxu0 %v878
    %1010 = vmatpush.bf16.msra.mxu0 %v874
    %1011 = vmatpush.bf16.msra.mxu0 %v870
    %1012 = vmatpush.bf16.msra.mxu0 %v866
    %1013 = vmatpush.bf16.msra.mxu0 %v862
    %1014 = vmatpush.bf16.msra.mxu0 %v858
    %1015 = vmatpush.bf16.msra.mxu0 %v854
    %1016 = vmatpush.bf16.msra.mxu0 %v850
    %1017 = vmatmul.bf16.gmra.mxu0 %v550
    %v1018 = vpop.f32.mrf.mxu0
    %v1019 = vadd.f32 %v1006, %v1018
    %v1020 = vpop.f32.mrf.mxu0
    %1021 = vdwg.mxu0
    %1022 = vmatpush.bf16.msra.mxu0 %v847
    %1023 = vmatpush.bf16.msra.mxu0 %v843
    %1024 = vmatpush.bf16.msra.mxu0 %v839
    %1025 = vmatpush.bf16.msra.mxu0 %v835
    %1026 = vmatpush.bf16.msra.mxu0 %v831
    %1027 = vmatpush.bf16.msra.mxu0 %v827
    %1028 = vmatpush.bf16.msra.mxu0 %v823
    %1029 = vmatpush.bf16.msra.mxu0 %v819
    %1030 = vmatmul.bf16.gmra.mxu0 %v549
    %v1031 = vpop.f32.mrf.mxu0
    %v1032 = vadd.f32 %v619, %v1031
    %v1033 = vpop.f32.mrf.mxu0
    %1034 = vdwg.mxu0
    %1035 = vmatpush.bf16.msra.mxu0 %v879
    %1036 = vmatpush.bf16.msra.mxu0 %v875
    %1037 = vmatpush.bf16.msra.mxu0 %v871
    %1038 = vmatpush.bf16.msra.mxu0 %v867
    %1039 = vmatpush.bf16.msra.mxu0 %v863
    %1040 = vmatpush.bf16.msra.mxu0 %v859
    %1041 = vmatpush.bf16.msra.mxu0 %v855
    %1042 = vmatpush.bf16.msra.mxu0 %v851
    %1043 = vmatmul.bf16.gmra.mxu0 %v550
    %v1044 = vpop.f32.mrf.mxu0
    %v1045 = vadd.f32 %v1032, %v1044
    %v1046 = vpop.f32.mrf.mxu0
    %1047 = vdwg.mxu0
    %v1048 = vmul.f32 %v967, 0.2
    %v1049 = vmul.f32 %v993, 0.2
    %v1050 = vmul.f32 %v1019, 0.2
    %v1051 = vmul.f32 %v1045, 0.2
    %v1052 = vmax.f32 %v967, %v1048
    %v1053 = vmax.f32 %v993, %v1049
    %v1054 = vmax.f32 %v1019, %v1050
    %v1055 = vmax.f32 %v1045, %v1051
    %s1056 = scalar_lea.vmem [#allocation14], 8
    %v1057 = vld [vmem:[%s1056] ss:$2 sm:$0xf]
    %s1058 = scalar_lea.vmem [#allocation14], 9
    %v1059 = vld [vmem:[%s1058] ss:$2 sm:$0xf]
    %v1060 = vrot.slane %v1052, 4
    %v1061 = vadd.f32 %v1052, %v1060
    %v1062 = vrot.slane %v1061, 2
    %v1063 = vadd.f32 %v1061, %v1062
    %v1064 = vrot.slane %v1063, 1
    %v1065 = vadd.f32 %v1063, %v1064
    %v1066 = vrot.slane %v1053, 4
    %v1067 = vadd.f32 %v1053, %v1066
    %v1068 = vrot.slane %v1067, 2
    %v1069 = vadd.f32 %v1067, %v1068
    %v1070 = vrot.slane %v1069, 1
    %v1071 = vadd.f32 %v1069, %v1070
    %v1072 = vrot.slane %v1054, 4
    %v1073 = vadd.f32 %v1054, %v1072
    %v1074 = vrot.slane %v1073, 2
    %v1075 = vadd.f32 %v1073, %v1074
    %v1076 = vrot.slane %v1075, 1
    %v1077 = vadd.f32 %v1075, %v1076
    %v1078 = vrot.slane %v1055, 4
    %v1079 = vadd.f32 %v1055, %v1078
    %v1080 = vrot.slane %v1079, 2
    %v1081 = vadd.f32 %v1079, %v1080
    %v1082 = vrot.slane %v1081, 1
    %v1083 = vadd.f32 %v1081, %v1082
    %v1084 = vmul.f32 %v1065, 0.125
    %v1085 = vmul.f32 %v1071, 0.125
    %v1086 = vmul.f32 %v1077, 0.125
    %v1087 = vmul.f32 %v1083, 0.125
    %v1088 = vmul.f32 %v1052, %v1052
    %v1089 = vmul.f32 %v1053, %v1053
    %v1090 = vmul.f32 %v1054, %v1054
    %v1091 = vmul.f32 %v1055, %v1055
    %v1092 = vrot.slane %v1088, 4
    %v1093 = vadd.f32 %v1088, %v1092
    %v1094 = vrot.slane %v1093, 2
    %v1095 = vadd.f32 %v1093, %v1094
    %v1096 = vrot.slane %v1095, 1
    %v1097 = vadd.f32 %v1095, %v1096
    %v1098 = vrot.slane %v1089, 4
    %v1099 = vadd.f32 %v1089, %v1098
    %v1100 = vrot.slane %v1099, 2
    %v1101 = vadd.f32 %v1099, %v1100
    %v1102 = vrot.slane %v1101, 1
    %v1103 = vadd.f32 %v1101, %v1102
    %v1104 = vrot.slane %v1090, 4
    %v1105 = vadd.f32 %v1090, %v1104
    %v1106 = vrot.slane %v1105, 2
    %v1107 = vadd.f32 %v1105, %v1106
    %v1108 = vrot.slane %v1107, 1
    %v1109 = vadd.f32 %v1107, %v1108
    %v1110 = vrot.slane %v1091, 4
    %v1111 = vadd.f32 %v1091, %v1110
    %v1112 = vrot.slane %v1111, 2
    %v1113 = vadd.f32 %v1111, %v1112
    %v1114 = vrot.slane %v1113, 1
    %v1115 = vadd.f32 %v1113, %v1114
    %v1116 = vmul.f32 %v1097, 0.125
    %v1117 = vmul.f32 %v1103, 0.125
    %v1118 = vmul.f32 %v1109, 0.125
    %v1119 = vmul.f32 %v1115, 0.125
    %v1120 = vmul.f32 %v1084, %v1084
    %v1121 = vmul.f32 %v1085, %v1085
    %v1122 = vmul.f32 %v1086, %v1086
    %v1123 = vmul.f32 %v1087, %v1087
    %v1124 = vsub.f32 %v1116, %v1120
    %v1125 = vsub.f32 %v1117, %v1121
    %v1126 = vsub.f32 %v1118, %v1122
    %v1127 = vsub.f32 %v1119, %v1123
    %v1128 = vsub.f32 %v1052, %v1084
    %v1129 = vsub.f32 %v1053, %v1085
    %v1130 = vsub.f32 %v1054, %v1086
    %v1131 = vsub.f32 %v1055, %v1087
    %v1132 = vadd.f32 %v1124, 0.8
    %v1133 = vadd.f32 %v1125, 0.8
    %v1134 = vadd.f32 %v1126, 0.8
    %v1135 = vadd.f32 %v1127, 0.8
    %v1136 = vrsqrt.pop %v1132
    %v1137 = vmul.f32 %v1136, %v1132
    %v1138 = vmul.f32 %v1137, %v1136
    %v1139 = vmul.f32 0.5, %v1138
    %v1140 = vsub.f32 1.5, %v1139
    %v1141 = vmul.f32 %v1136, %v1140
    %vm1142 = vweird.f32 %v1132
    %vm1143 = vweird.f32 %v1136
    %vm1144 = vmor %vm1142, %vm1143
    %v1145 = vsel %vm1144, %v1136, %v1141
    %v1146 = vrsqrt.pop %v1133
    %v1147 = vmul.f32 %v1146, %v1133
    %v1148 = vmul.f32 %v1147, %v1146
    %v1149 = vmul.f32 0.5, %v1148
    %v1150 = vsub.f32 1.5, %v1149
    %v1151 = vmul.f32 %v1146, %v1150
    %vm1152 = vweird.f32 %v1133
    %vm1153 = vweird.f32 %v1146
    %vm1154 = vmor %vm1152, %vm1153
    %v1155 = vsel %vm1154, %v1146, %v1151
    %v1156 = vrsqrt.pop %v1134
    %v1157 = vmul.f32 %v1156, %v1134
    %v1158 = vmul.f32 %v1157, %v1156
    %v1159 = vmul.f32 0.5, %v1158
    %v1160 = vsub.f32 1.5, %v1159
    %v1161 = vmul.f32 %v1156, %v1160
    %vm1162 = vweird.f32 %v1134
    %vm1163 = vweird.f32 %v1156
    %vm1164 = vmor %vm1162, %vm1163
    %v1165 = vsel %vm1164, %v1156, %v1161
    %v1166 = vrsqrt.pop %v1135
    %v1167 = vmul.f32 %v1166, %v1135
    %v1168 = vmul.f32 %v1167, %v1166
    %v1169 = vmul.f32 0.5, %v1168
    %v1170 = vsub.f32 1.5, %v1169
    %v1171 = vmul.f32 %v1166, %v1170
    %vm1172 = vweird.f32 %v1135
    %vm1173 = vweird.f32 %v1166
    %vm1174 = vmor %vm1172, %vm1173
    %v1175 = vsel %vm1174, %v1166, %v1171
    %v1176 = vmul.f32 %v1128, %v1145
    %v1177 = vmul.f32 %v1129, %v1155
    %v1178 = vmul.f32 %v1130, %v1165
    %v1179 = vmul.f32 %v1131, %v1175
    %v1181 = vperm.slane %v1057, 0
    %v1182 = vperm.slane %v1057, 1
    %v1183 = vperm.slane %v1057, 2
    %v1184 = vperm.slane %v1057, 3
    %v1189 = vmul.f32 %v1176, %v1181
    %v1190 = vmul.f32 %v1177, %v1182
    %v1191 = vmul.f32 %v1178, %v1183
    %v1192 = vmul.f32 %v1179, %v1184
    %v1194 = vperm.slane %v1059, 0
    %v1195 = vperm.slane %v1059, 1
    %v1196 = vperm.slane %v1059, 2
    %v1197 = vperm.slane %v1059, 3
    %v1202 = vadd.f32 %v1189, %v1194
    %v1203 = vadd.f32 %v1190, %v1195
    %v1204 = vadd.f32 %v1191, %v1196
    %v1205 = vadd.f32 %v1192, %v1197
    %v1206 = vld [vmem:[#allocation13 + $0x8] sm:$0xff]
    %v1207 = vpack.c.bf16 %v1202, %v1202
    %v1208 = vpack.c.bf16 %v1203, %v1203
    %v1209 = vpack.c.bf16 %v1204, %v1204
    %v1210 = vpack.c.bf16 %v1205, %v1205
    %v1211 = vld [vmem:[#allocation11] sm:$0xff]
    %v1212 = vld [vmem:[#allocation11 + $0x8] sm:$0xff]
    %v1213 = vld [vmem:[#allocation11 + $0x10] sm:$0xff]
    %v1214 = vld [vmem:[#allocation11 + $0x18] sm:$0xf]
    %v1215 = vld [vmem:[#allocation11 + $0x1c] sm:$0xff]
    %v1216 = vld [vmem:[#allocation11 + $0x24] sm:$0xff]
    %v1217 = vld [vmem:[#allocation11 + $0x2c] sm:$0xff]
    %v1218 = vld [vmem:[#allocation11 + $0x34] sm:$0xf]
    %v1219 = vld [vmem:[#allocation11 + $0x38] sm:$0xff]
    %v1220 = vld [vmem:[#allocation11 + $0x40] sm:$0xff]
    %v1221 = vld [vmem:[#allocation11 + $0x48] sm:$0xff]
    %v1222 = vld [vmem:[#allocation11 + $0x50] sm:$0xf]
    %v1223 = vld [vmem:[#allocation11 + $0x54] sm:$0xff]
    %v1224 = vld [vmem:[#allocation11 + $0x5c] sm:$0xff]
    %v1225 = vld [vmem:[#allocation11 + $0x64] sm:$0xff]
    %v1226 = vld [vmem:[#allocation11 + $0x6c] sm:$0xf]
    %v1227 = vld [vmem:[#allocation11 + $0x70] sm:$0xff]
    %v1228 = vld [vmem:[#allocation11 + $0x78] sm:$0xff]
    %v1229 = vld [vmem:[#allocation11 + $0x80] sm:$0xff]
    %v1230 = vld [vmem:[#allocation11 + $0x88] sm:$0xf]
    %v1231 = vld [vmem:[#allocation11 + $0x8c] sm:$0xff]
    %v1232 = vld [vmem:[#allocation11 + $0x94] sm:$0xff]
    %v1233 = vld [vmem:[#allocation11 + $0x9c] sm:$0xff]
    %v1234 = vld [vmem:[#allocation11 + $0xa4] sm:$0xf]
    %v1235 = vld [vmem:[#allocation11 + $0xa8] sm:$0xff]
    %v1236 = vld [vmem:[#allocation11 + $0xb0] sm:$0xff]
    %v1237 = vld [vmem:[#allocation11 + $0xb8] sm:$0xff]
    %v1238 = vld [vmem:[#allocation11 + $0xc0] sm:$0xf]
    %v1239 = vld [vmem:[#allocation11 + $0xc4] sm:$0xff]
    %v1240 = vld [vmem:[#allocation11 + $0xcc] sm:$0xff]
    %v1241 = vld [vmem:[#allocation11 + $0xd4] sm:$0xff]
    %v1242 = vld [vmem:[#allocation11 + $0xdc] sm:$0xf]
    %v1243 = vld [vmem:[#allocation11 + $0xe0] sm:$0xff]
    %v1244 = vld [vmem:[#allocation11 + $0xe8] sm:$0xff]
    %v1245 = vld [vmem:[#allocation11 + $0xf0] sm:$0xff]
    %v1246 = vld [vmem:[#allocation11 + $0xf8] sm:$0xf]
    %v1247 = vld [vmem:[#allocation11 + $0xfc] sm:$0xff]
    %v1248 = vld [vmem:[#allocation11 + $0x104] sm:$0xff]
    %v1249 = vld [vmem:[#allocation11 + $0x10c] sm:$0xff]
    %v1250 = vld [vmem:[#allocation11 + $0x114] sm:$0xf]
    %v1251 = vld [vmem:[#allocation11 + $0x118] sm:$0xff]
    %v1252 = vld [vmem:[#allocation11 + $0x120] sm:$0xff]
    %v1253 = vld [vmem:[#allocation11 + $0x128] sm:$0xff]
    %v1254 = vld [vmem:[#allocation11 + $0x130] sm:$0xf]
    %v1255 = vld [vmem:[#allocation11 + $0x134] sm:$0xff]
    %v1256 = vld [vmem:[#allocation11 + $0x13c] sm:$0xff]
    %v1257 = vld [vmem:[#allocation11 + $0x144] sm:$0xff]
    %v1258 = vld [vmem:[#allocation11 + $0x14c] sm:$0xf]
    %v1259 = vld [vmem:[#allocation11 + $0x150] sm:$0xff]
    %v1260 = vld [vmem:[#allocation11 + $0x158] sm:$0xff]
    %v1261 = vld [vmem:[#allocation11 + $0x160] sm:$0xff]
    %v1262 = vld [vmem:[#allocation11 + $0x168] sm:$0xf]
    %v1263 = vld [vmem:[#allocation11 + $0x16c] sm:$0xff]
    %v1264 = vld [vmem:[#allocation11 + $0x174] sm:$0xff]
    %v1265 = vld [vmem:[#allocation11 + $0x17c] sm:$0xff]
    %v1266 = vld [vmem:[#allocation11 + $0x184] sm:$0xf]
    %v1267 = vld [vmem:[#allocation11 + $0x188] sm:$0xff]
    %v1268 = vld [vmem:[#allocation11 + $0x190] sm:$0xff]
    %v1269 = vld [vmem:[#allocation11 + $0x198] sm:$0xff]
    %v1270 = vld [vmem:[#allocation11 + $0x1a0] sm:$0xf]
    %v1271 = vld [vmem:[#allocation11 + $0x1a4] sm:$0xff]
    %v1272 = vld [vmem:[#allocation11 + $0x1ac] sm:$0xff]
    %v1273 = vld [vmem:[#allocation11 + $0x1b4] sm:$0xff]
    %v1274 = vld [vmem:[#allocation11 + $0x1bc] sm:$0xf]
    %v1275 = vld [vmem:[#allocation11 + $0x1c0] sm:$0xff]
    %v1276 = vld [vmem:[#allocation11 + $0x1c8] sm:$0xff]
    %v1277 = vld [vmem:[#allocation11 + $0x1d0] sm:$0xff]
    %v1278 = vld [vmem:[#allocation11 + $0x1d8] sm:$0xf]
    %v1279 = vld [vmem:[#allocation11 + $0x1dc] sm:$0xff]
    %v1280 = vld [vmem:[#allocation11 + $0x1e4] sm:$0xff]
    %v1281 = vld [vmem:[#allocation11 + $0x1ec] sm:$0xff]
    %v1282 = vld [vmem:[#allocation11 + $0x1f4] sm:$0xf]
    %v1283 = vld [vmem:[#allocation11 + $0x1f8] sm:$0xff]
    %v1284 = vld [vmem:[#allocation11 + $0x200] sm:$0xff]
    %v1285 = vld [vmem:[#allocation11 + $0x208] sm:$0xff]
    %v1286 = vld [vmem:[#allocation11 + $0x210] sm:$0xf]
    %v1287 = vld [vmem:[#allocation11 + $0x214] sm:$0xff]
    %v1288 = vld [vmem:[#allocation11 + $0x21c] sm:$0xff]
    %v1289 = vld [vmem:[#allocation11 + $0x224] sm:$0xff]
    %v1290 = vld [vmem:[#allocation11 + $0x22c] sm:$0xf]
    %v1291 = vld [vmem:[#allocation11 + $0x230] sm:$0xff]
    %v1292 = vld [vmem:[#allocation11 + $0x238] sm:$0xff]
    %v1293 = vld [vmem:[#allocation11 + $0x240] sm:$0xff]
    %v1294 = vld [vmem:[#allocation11 + $0x248] sm:$0xf]
    %v1295 = vld [vmem:[#allocation11 + $0x24c] sm:$0xff]
    %v1296 = vld [vmem:[#allocation11 + $0x254] sm:$0xff]
    %v1297 = vld [vmem:[#allocation11 + $0x25c] sm:$0xff]
    %v1298 = vld [vmem:[#allocation11 + $0x264] sm:$0xf]
    %v1299 = vld [vmem:[#allocation11 + $0x268] sm:$0xff]
    %v1300 = vld [vmem:[#allocation11 + $0x270] sm:$0xff]
    %v1301 = vld [vmem:[#allocation11 + $0x278] sm:$0xff]
    %v1302 = vld [vmem:[#allocation11 + $0x280] sm:$0xf]
    %v1303 = vld [vmem:[#allocation11 + $0x284] sm:$0xff]
    %v1304 = vld [vmem:[#allocation11 + $0x28c] sm:$0xff]
    %v1305 = vld [vmem:[#allocation11 + $0x294] sm:$0xff]
    %v1306 = vld [vmem:[#allocation11 + $0x29c] sm:$0xf]
    %v1307 = vld [vmem:[#allocation11 + $0x2a0] sm:$0xff]
    %v1308 = vld [vmem:[#allocation11 + $0x2a8] sm:$0xff]
    %v1309 = vld [vmem:[#allocation11 + $0x2b0] sm:$0xff]
    %v1310 = vld [vmem:[#allocation11 + $0x2b8] sm:$0xf]
    %v1311 = vld [vmem:[#allocation11 + $0x2bc] sm:$0xff]
    %v1312 = vld [vmem:[#allocation11 + $0x2c4] sm:$0xff]
    %v1313 = vld [vmem:[#allocation11 + $0x2cc] sm:$0xff]
    %v1314 = vld [vmem:[#allocation11 + $0x2d4] sm:$0xf]
    %v1315 = vld [vmem:[#allocation11 + $0x2d8] sm:$0xff]
    %v1316 = vld [vmem:[#allocation11 + $0x2e0] sm:$0xff]
    %v1317 = vld [vmem:[#allocation11 + $0x2e8] sm:$0xff]
    %v1318 = vld [vmem:[#allocation11 + $0x2f0] sm:$0xf]
    %v1319 = vld [vmem:[#allocation11 + $0x2f4] sm:$0xff]
    %v1320 = vld [vmem:[#allocation11 + $0x2fc] sm:$0xff]
    %v1321 = vld [vmem:[#allocation11 + $0x304] sm:$0xff]
    %v1322 = vld [vmem:[#allocation11 + $0x30c] sm:$0xf]
    %v1323 = vld [vmem:[#allocation11 + $0x310] sm:$0xff]
    %v1324 = vld [vmem:[#allocation11 + $0x318] sm:$0xff]
    %v1325 = vld [vmem:[#allocation11 + $0x320] sm:$0xff]
    %v1326 = vld [vmem:[#allocation11 + $0x328] sm:$0xf]
    %v1327 = vld [vmem:[#allocation11 + $0x32c] sm:$0xff]
    %v1328 = vld [vmem:[#allocation11 + $0x334] sm:$0xff]
    %v1329 = vld [vmem:[#allocation11 + $0x33c] sm:$0xff]
    %v1330 = vld [vmem:[#allocation11 + $0x344] sm:$0xf]
    %v1331 = vld [vmem:[#allocation11 + $0x348] sm:$0xff]
    %v1332 = vld [vmem:[#allocation11 + $0x350] sm:$0xff]
    %v1333 = vld [vmem:[#allocation11 + $0x358] sm:$0xff]
    %v1334 = vld [vmem:[#allocation11 + $0x360] sm:$0xf]
    %v1335 = vld [vmem:[#allocation11 + $0x364] sm:$0xff]
    %v1336 = vld [vmem:[#allocation11 + $0x36c] sm:$0xff]
    %v1337 = vld [vmem:[#allocation11 + $0x374] sm:$0xff]
    %v1338 = vld [vmem:[#allocation11 + $0x37c] sm:$0xf]
    %v1339 = vld [vmem:[#allocation11 + $0x380] sm:$0xff]
    %v1340 = vld [vmem:[#allocation11 + $0x388] sm:$0xff]
    %v1341 = vld [vmem:[#allocation11 + $0x390] sm:$0xff]
    %v1342 = vld [vmem:[#allocation11 + $0x398] sm:$0xf]
    %v1343 = vld [vmem:[#allocation11 + $0x39c] sm:$0xff]
    %v1344 = vld [vmem:[#allocation11 + $0x3a4] sm:$0xff]
    %v1345 = vld [vmem:[#allocation11 + $0x3ac] sm:$0xff]
    %v1346 = vld [vmem:[#allocation11 + $0x3b4] sm:$0xf]
    %v1347 = vld [vmem:[#allocation11 + $0x3b8] sm:$0xff]
    %v1348 = vld [vmem:[#allocation11 + $0x3c0] sm:$0xff]
    %v1349 = vld [vmem:[#allocation11 + $0x3c8] sm:$0xff]
    %v1350 = vld [vmem:[#allocation11 + $0x3d0] sm:$0xf]
    %v1351 = vld [vmem:[#allocation11 + $0x3d4] sm:$0xff]
    %v1352 = vld [vmem:[#allocation11 + $0x3dc] sm:$0xff]
    %v1353 = vld [vmem:[#allocation11 + $0x3e4] sm:$0xff]
    %v1354 = vld [vmem:[#allocation11 + $0x3ec] sm:$0xf]
    %v1355 = vld [vmem:[#allocation11 + $0x3f0] sm:$0xff]
    %v1356 = vld [vmem:[#allocation11 + $0x3f8] sm:$0xff]
    %v1357 = vld [vmem:[#allocation11 + $0x400] sm:$0xff]
    %v1358 = vld [vmem:[#allocation11 + $0x408] sm:$0xf]
    %v1359 = vld [vmem:[#allocation11 + $0x40c] sm:$0xff]
    %v1360 = vld [vmem:[#allocation11 + $0x414] sm:$0xff]
    %v1361 = vld [vmem:[#allocation11 + $0x41c] sm:$0xff]
    %v1362 = vld [vmem:[#allocation11 + $0x424] sm:$0xf]
    %v1363 = vld [vmem:[#allocation11 + $0x428] sm:$0xff]
    %v1364 = vld [vmem:[#allocation11 + $0x430] sm:$0xff]
    %v1365 = vld [vmem:[#allocation11 + $0x438] sm:$0xff]
    %v1366 = vld [vmem:[#allocation11 + $0x440] sm:$0xf]
    %v1367 = vld [vmem:[#allocation11 + $0x444] sm:$0xff]
    %v1368 = vld [vmem:[#allocation11 + $0x44c] sm:$0xff]
    %v1369 = vld [vmem:[#allocation11 + $0x454] sm:$0xff]
    %v1370 = vld [vmem:[#allocation11 + $0x45c] sm:$0xf]
    %v1371 = vld [vmem:[#allocation11 + $0x460] sm:$0xff]
    %v1372 = vld [vmem:[#allocation11 + $0x468] sm:$0xff]
    %v1373 = vld [vmem:[#allocation11 + $0x470] sm:$0xff]
    %v1374 = vld [vmem:[#allocation11 + $0x478] sm:$0xf]
    %v1375 = vld [vmem:[#allocation11 + $0x47c] sm:$0xff]
    %v1376 = vld [vmem:[#allocation11 + $0x484] sm:$0xff]
    %v1377 = vld [vmem:[#allocation11 + $0x48c] sm:$0xff]
    %v1378 = vld [vmem:[#allocation11 + $0x494] sm:$0xf]
    %v1379 = vld [vmem:[#allocation11 + $0x498] sm:$0xff]
    %v1380 = vld [vmem:[#allocation11 + $0x4a0] sm:$0xff]
    %v1381 = vld [vmem:[#allocation11 + $0x4a8] sm:$0xff]
    %v1382 = vld [vmem:[#allocation11 + $0x4b0] sm:$0xf]
    %v1383 = vld [vmem:[#allocation11 + $0x4b4] sm:$0xff]
    %v1384 = vld [vmem:[#allocation11 + $0x4bc] sm:$0xff]
    %v1385 = vld [vmem:[#allocation11 + $0x4c4] sm:$0xff]
    %v1386 = vld [vmem:[#allocation11 + $0x4cc] sm:$0xf]
    %v1387 = vld [vmem:[#allocation11 + $0x4d0] sm:$0xff]
    %v1388 = vld [vmem:[#allocation11 + $0x4d8] sm:$0xff]
    %v1389 = vld [vmem:[#allocation11 + $0x4e0] sm:$0xff]
    %v1390 = vld [vmem:[#allocation11 + $0x4e8] sm:$0xf]
    %v1391 = vld [vmem:[#allocation11 + $0x4ec] sm:$0xff]
    %v1392 = vld [vmem:[#allocation11 + $0x4f4] sm:$0xff]
    %v1393 = vld [vmem:[#allocation11 + $0x4fc] sm:$0xff]
    %v1394 = vld [vmem:[#allocation11 + $0x504] sm:$0xf]
    %v1395 = vld [vmem:[#allocation11 + $0x508] sm:$0xff]
    %v1396 = vld [vmem:[#allocation11 + $0x510] sm:$0xff]
    %v1397 = vld [vmem:[#allocation11 + $0x518] sm:$0xff]
    %v1398 = vld [vmem:[#allocation11 + $0x520] sm:$0xf]
    %v1399 = vld [vmem:[#allocation11 + $0x524] sm:$0xff]
    %v1400 = vld [vmem:[#allocation11 + $0x52c] sm:$0xff]
    %v1401 = vld [vmem:[#allocation11 + $0x534] sm:$0xff]
    %v1402 = vld [vmem:[#allocation11 + $0x53c] sm:$0xf]
    %v1403 = vld [vmem:[#allocation11 + $0x540] sm:$0xff]
    %v1404 = vld [vmem:[#allocation11 + $0x548] sm:$0xff]
    %v1405 = vld [vmem:[#allocation11 + $0x550] sm:$0xff]
    %v1406 = vld [vmem:[#allocation11 + $0x558] sm:$0xf]
    %v1407 = vld [vmem:[#allocation11 + $0x55c] sm:$0xff]
    %v1408 = vld [vmem:[#allocation11 + $0x564] sm:$0xff]
    %v1409 = vld [vmem:[#allocation11 + $0x56c] sm:$0xff]
    %v1410 = vld [vmem:[#allocation11 + $0x574] sm:$0xf]
    %v1411 = vld [vmem:[#allocation11 + $0x578] sm:$0xff]
    %v1412 = vld [vmem:[#allocation11 + $0x580] sm:$0xff]
    %v1413 = vld [vmem:[#allocation11 + $0x588] sm:$0xff]
    %v1414 = vld [vmem:[#allocation11 + $0x590] sm:$0xf]
    %v1415 = vld [vmem:[#allocation11 + $0x594] sm:$0xff]
    %v1416 = vld [vmem:[#allocation11 + $0x59c] sm:$0xff]
    %v1417 = vld [vmem:[#allocation11 + $0x5a4] sm:$0xff]
    %v1418 = vld [vmem:[#allocation11 + $0x5ac] sm:$0xf]
    %v1419 = vld [vmem:[#allocation11 + $0x5b0] sm:$0xff]
    %v1420 = vld [vmem:[#allocation11 + $0x5b8] sm:$0xff]
    %v1421 = vld [vmem:[#allocation11 + $0x5c0] sm:$0xff]
    %v1422 = vld [vmem:[#allocation11 + $0x5c8] sm:$0xf]
    %v1423 = vld [vmem:[#allocation11 + $0x5cc] sm:$0xff]
    %v1424 = vld [vmem:[#allocation11 + $0x5d4] sm:$0xff]
    %v1425 = vld [vmem:[#allocation11 + $0x5dc] sm:$0xff]
    %v1426 = vld [vmem:[#allocation11 + $0x5e4] sm:$0xf]
    %v1427 = vld [vmem:[#allocation11 + $0x5e8] sm:$0xff]
    %v1428 = vld [vmem:[#allocation11 + $0x5f0] sm:$0xff]
    %v1429 = vld [vmem:[#allocation11 + $0x5f8] sm:$0xff]
    %v1430 = vld [vmem:[#allocation11 + $0x600] sm:$0xf]
    %v1431 = vld [vmem:[#allocation11 + $0x604] sm:$0xff]
    %v1432 = vld [vmem:[#allocation11 + $0x60c] sm:$0xff]
    %v1433 = vld [vmem:[#allocation11 + $0x614] sm:$0xff]
    %v1434 = vld [vmem:[#allocation11 + $0x61c] sm:$0xf]
    %v1435 = vld [vmem:[#allocation11 + $0x620] sm:$0xff]
    %v1436 = vld [vmem:[#allocation11 + $0x628] sm:$0xff]
    %v1437 = vld [vmem:[#allocation11 + $0x630] sm:$0xff]
    %v1438 = vld [vmem:[#allocation11 + $0x638] sm:$0xf]
    %v1439 = vld [vmem:[#allocation11 + $0x63c] sm:$0xff]
    %v1440 = vld [vmem:[#allocation11 + $0x644] sm:$0xff]
    %v1441 = vld [vmem:[#allocation11 + $0x64c] sm:$0xff]
    %v1442 = vld [vmem:[#allocation11 + $0x654] sm:$0xf]
    %v1443 = vld [vmem:[#allocation11 + $0x658] sm:$0xff]
    %v1444 = vld [vmem:[#allocation11 + $0x660] sm:$0xff]
    %v1445 = vld [vmem:[#allocation11 + $0x668] sm:$0xff]
    %v1446 = vld [vmem:[#allocation11 + $0x670] sm:$0xf]
    %v1447 = vld [vmem:[#allocation11 + $0x674] sm:$0xff]
    %v1448 = vld [vmem:[#allocation11 + $0x67c] sm:$0xff]
    %v1449 = vld [vmem:[#allocation11 + $0x684] sm:$0xff]
    %v1450 = vld [vmem:[#allocation11 + $0x68c] sm:$0xf]
    %v1451 = vld [vmem:[#allocation11 + $0x690] sm:$0xff]
    %v1452 = vld [vmem:[#allocation11 + $0x698] sm:$0xff]
    %v1453 = vld [vmem:[#allocation11 + $0x6a0] sm:$0xff]
    %v1454 = vld [vmem:[#allocation11 + $0x6a8] sm:$0xf]
    %v1455 = vld [vmem:[#allocation11 + $0x6ac] sm:$0xff]
    %v1456 = vld [vmem:[#allocation11 + $0x6b4] sm:$0xff]
    %v1457 = vld [vmem:[#allocation11 + $0x6bc] sm:$0xff]
    %v1458 = vld [vmem:[#allocation11 + $0x6c4] sm:$0xf]
    %v1459 = vld [vmem:[#allocation11 + $0x6c8] sm:$0xff]
    %v1460 = vld [vmem:[#allocation11 + $0x6d0] sm:$0xff]
    %v1461 = vld [vmem:[#allocation11 + $0x6d8] sm:$0xff]
    %v1462 = vld [vmem:[#allocation11 + $0x6e0] sm:$0xf]
    %v1463 = vld [vmem:[#allocation11 + $0x6e4] sm:$0xff]
    %v1464 = vld [vmem:[#allocation11 + $0x6ec] sm:$0xff]
    %v1465 = vld [vmem:[#allocation11 + $0x6f4] sm:$0xff]
    %v1466 = vld [vmem:[#allocation11 + $0x6fc] sm:$0xf]
    %v1468 = vperm.slane %v1206, 0
    %v1469 = vperm.slane %v1206, 1
    %v1470 = vperm.slane %v1206, 2
    %v1471 = vperm.slane %v1206, 3
    %v1472 = vperm.slane %v1206, 4
    %v1473 = vperm.slane %v1206, 5
    %v1474 = vperm.slane %v1206, 6
    %v1738 = vunpack.c.l.b16 %v1211
    %v1739 = vunpack.c.h.b16 %v1211
    %v1740 = vunpack.c.l.b16 %v1212
    %v1741 = vunpack.c.h.b16 %v1212
    %v1742 = vunpack.c.l.b16 %v1213
    %v1743 = vunpack.c.h.b16 %v1213
    %v1744 = vunpack.c.l.b16 %v1214
    %v1745 = vunpack.c.l.b16 %v1215
    %v1746 = vunpack.c.h.b16 %v1215
    %v1747 = vunpack.c.l.b16 %v1216
    %v1748 = vunpack.c.h.b16 %v1216
    %v1749 = vunpack.c.l.b16 %v1217
    %v1750 = vunpack.c.h.b16 %v1217
    %v1751 = vunpack.c.l.b16 %v1218
    %v1752 = vunpack.c.l.b16 %v1219
    %v1753 = vunpack.c.h.b16 %v1219
    %v1754 = vunpack.c.l.b16 %v1220
    %v1755 = vunpack.c.h.b16 %v1220
    %v1756 = vunpack.c.l.b16 %v1221
    %v1757 = vunpack.c.h.b16 %v1221
    %v1758 = vunpack.c.l.b16 %v1222
    %v1759 = vunpack.c.l.b16 %v1223
    %v1760 = vunpack.c.h.b16 %v1223
    %v1761 = vunpack.c.l.b16 %v1224
    %v1762 = vunpack.c.h.b16 %v1224
    %v1763 = vunpack.c.l.b16 %v1225
    %v1764 = vunpack.c.h.b16 %v1225
    %v1765 = vunpack.c.l.b16 %v1226
    %v1766 = vunpack.c.l.b16 %v1227
    %v1767 = vunpack.c.h.b16 %v1227
    %v1768 = vunpack.c.l.b16 %v1228
    %v1769 = vunpack.c.h.b16 %v1228
    %v1770 = vunpack.c.l.b16 %v1229
    %v1771 = vunpack.c.h.b16 %v1229
    %v1772 = vunpack.c.l.b16 %v1230
    %v1773 = vunpack.c.l.b16 %v1231
    %v1774 = vunpack.c.h.b16 %v1231
    %v1775 = vunpack.c.l.b16 %v1232
    %v1776 = vunpack.c.h.b16 %v1232
    %v1777 = vunpack.c.l.b16 %v1233
    %v1778 = vunpack.c.h.b16 %v1233
    %v1779 = vunpack.c.l.b16 %v1234
    %v1780 = vunpack.c.l.b16 %v1235
    %v1781 = vunpack.c.h.b16 %v1235
    %v1782 = vunpack.c.l.b16 %v1236
    %v1783 = vunpack.c.h.b16 %v1236
    %v1784 = vunpack.c.l.b16 %v1237
    %v1785 = vunpack.c.h.b16 %v1237
    %v1786 = vunpack.c.l.b16 %v1238
    %v1787 = vunpack.c.l.b16 %v1239
    %v1788 = vunpack.c.h.b16 %v1239
    %v1789 = vunpack.c.l.b16 %v1240
    %v1790 = vunpack.c.h.b16 %v1240
    %v1791 = vunpack.c.l.b16 %v1241
    %v1792 = vunpack.c.h.b16 %v1241
    %v1793 = vunpack.c.l.b16 %v1242
    %v1794 = vunpack.c.l.b16 %v1243
    %v1795 = vunpack.c.h.b16 %v1243
    %v1796 = vunpack.c.l.b16 %v1244
    %v1797 = vunpack.c.h.b16 %v1244
    %v1798 = vunpack.c.l.b16 %v1245
    %v1799 = vunpack.c.h.b16 %v1245
    %v1800 = vunpack.c.l.b16 %v1246
    %v1801 = vunpack.c.l.b16 %v1247
    %v1802 = vunpack.c.h.b16 %v1247
    %v1803 = vunpack.c.l.b16 %v1248
    %v1804 = vunpack.c.h.b16 %v1248
    %v1805 = vunpack.c.l.b16 %v1249
    %v1806 = vunpack.c.h.b16 %v1249
    %v1807 = vunpack.c.l.b16 %v1250
    %v1808 = vunpack.c.l.b16 %v1251
    %v1809 = vunpack.c.h.b16 %v1251
    %v1810 = vunpack.c.l.b16 %v1252
    %v1811 = vunpack.c.h.b16 %v1252
    %v1812 = vunpack.c.l.b16 %v1253
    %v1813 = vunpack.c.h.b16 %v1253
    %v1814 = vunpack.c.l.b16 %v1254
    %v1815 = vunpack.c.l.b16 %v1255
    %v1816 = vunpack.c.h.b16 %v1255
    %v1817 = vunpack.c.l.b16 %v1256
    %v1818 = vunpack.c.h.b16 %v1256
    %v1819 = vunpack.c.l.b16 %v1257
    %v1820 = vunpack.c.h.b16 %v1257
    %v1821 = vunpack.c.l.b16 %v1258
    %v1822 = vunpack.c.l.b16 %v1259
    %v1823 = vunpack.c.h.b16 %v1259
    %v1824 = vunpack.c.l.b16 %v1260
    %v1825 = vunpack.c.h.b16 %v1260
    %v1826 = vunpack.c.l.b16 %v1261
    %v1827 = vunpack.c.h.b16 %v1261
    %v1828 = vunpack.c.l.b16 %v1262
    %v1829 = vunpack.c.l.b16 %v1263
    %v1830 = vunpack.c.h.b16 %v1263
    %v1831 = vunpack.c.l.b16 %v1264
    %v1832 = vunpack.c.h.b16 %v1264
    %v1833 = vunpack.c.l.b16 %v1265
    %v1834 = vunpack.c.h.b16 %v1265
    %v1835 = vunpack.c.l.b16 %v1266
    %v1836 = vunpack.c.l.b16 %v1267
    %v1837 = vunpack.c.h.b16 %v1267
    %v1838 = vunpack.c.l.b16 %v1268
    %v1839 = vunpack.c.h.b16 %v1268
    %v1840 = vunpack.c.l.b16 %v1269
    %v1841 = vunpack.c.h.b16 %v1269
    %v1842 = vunpack.c.l.b16 %v1270
    %v1843 = vunpack.c.l.b16 %v1271
    %v1844 = vunpack.c.h.b16 %v1271
    %v1845 = vunpack.c.l.b16 %v1272
    %v1846 = vunpack.c.h.b16 %v1272
    %v1847 = vunpack.c.l.b16 %v1273
    %v1848 = vunpack.c.h.b16 %v1273
    %v1849 = vunpack.c.l.b16 %v1274
    %v1850 = vunpack.c.l.b16 %v1275
    %v1851 = vunpack.c.h.b16 %v1275
    %v1852 = vunpack.c.l.b16 %v1276
    %v1853 = vunpack.c.h.b16 %v1276
    %v1854 = vunpack.c.l.b16 %v1277
    %v1855 = vunpack.c.h.b16 %v1277
    %v1856 = vunpack.c.l.b16 %v1278
    %v1857 = vunpack.c.l.b16 %v1279
    %v1858 = vunpack.c.h.b16 %v1279
    %v1859 = vunpack.c.l.b16 %v1280
    %v1860 = vunpack.c.h.b16 %v1280
    %v1861 = vunpack.c.l.b16 %v1281
    %v1862 = vunpack.c.h.b16 %v1281
    %v1863 = vunpack.c.l.b16 %v1282
    %v1864 = vunpack.c.l.b16 %v1283
    %v1865 = vunpack.c.h.b16 %v1283
    %v1866 = vunpack.c.l.b16 %v1284
    %v1867 = vunpack.c.h.b16 %v1284
    %v1868 = vunpack.c.l.b16 %v1285
    %v1869 = vunpack.c.h.b16 %v1285
    %v1870 = vunpack.c.l.b16 %v1286
    %v1871 = vunpack.c.l.b16 %v1287
    %v1872 = vunpack.c.h.b16 %v1287
    %v1873 = vunpack.c.l.b16 %v1288
    %v1874 = vunpack.c.h.b16 %v1288
    %v1875 = vunpack.c.l.b16 %v1289
    %v1876 = vunpack.c.h.b16 %v1289
    %v1877 = vunpack.c.l.b16 %v1290
    %v1878 = vunpack.c.l.b16 %v1291
    %v1879 = vunpack.c.h.b16 %v1291
    %v1880 = vunpack.c.l.b16 %v1292
    %v1881 = vunpack.c.h.b16 %v1292
    %v1882 = vunpack.c.l.b16 %v1293
    %v1883 = vunpack.c.h.b16 %v1293
    %v1884 = vunpack.c.l.b16 %v1294
    %v1885 = vunpack.c.l.b16 %v1295
    %v1886 = vunpack.c.h.b16 %v1295
    %v1887 = vunpack.c.l.b16 %v1296
    %v1888 = vunpack.c.h.b16 %v1296
    %v1889 = vunpack.c.l.b16 %v1297
    %v1890 = vunpack.c.h.b16 %v1297
    %v1891 = vunpack.c.l.b16 %v1298
    %v1892 = vunpack.c.l.b16 %v1299
    %v1893 = vunpack.c.h.b16 %v1299
    %v1894 = vunpack.c.l.b16 %v1300
    %v1895 = vunpack.c.h.b16 %v1300
    %v1896 = vunpack.c.l.b16 %v1301
    %v1897 = vunpack.c.h.b16 %v1301
    %v1898 = vunpack.c.l.b16 %v1302
    %v1899 = vunpack.c.l.b16 %v1303
    %v1900 = vunpack.c.h.b16 %v1303
    %v1901 = vunpack.c.l.b16 %v1304
    %v1902 = vunpack.c.h.b16 %v1304
    %v1903 = vunpack.c.l.b16 %v1305
    %v1904 = vunpack.c.h.b16 %v1305
    %v1905 = vunpack.c.l.b16 %v1306
    %v1906 = vunpack.c.l.b16 %v1307
    %v1907 = vunpack.c.h.b16 %v1307
    %v1908 = vunpack.c.l.b16 %v1308
    %v1909 = vunpack.c.h.b16 %v1308
    %v1910 = vunpack.c.l.b16 %v1309
    %v1911 = vunpack.c.h.b16 %v1309
    %v1912 = vunpack.c.l.b16 %v1310
    %v1913 = vunpack.c.l.b16 %v1311
    %v1914 = vunpack.c.h.b16 %v1311
    %v1915 = vunpack.c.l.b16 %v1312
    %v1916 = vunpack.c.h.b16 %v1312
    %v1917 = vunpack.c.l.b16 %v1313
    %v1918 = vunpack.c.h.b16 %v1313
    %v1919 = vunpack.c.l.b16 %v1314
    %v1920 = vunpack.c.l.b16 %v1315
    %v1921 = vunpack.c.h.b16 %v1315
    %v1922 = vunpack.c.l.b16 %v1316
    %v1923 = vunpack.c.h.b16 %v1316
    %v1924 = vunpack.c.l.b16 %v1317
    %v1925 = vunpack.c.h.b16 %v1317
    %v1926 = vunpack.c.l.b16 %v1318
    %v1927 = vunpack.c.l.b16 %v1319
    %v1928 = vunpack.c.h.b16 %v1319
    %v1929 = vunpack.c.l.b16 %v1320
    %v1930 = vunpack.c.h.b16 %v1320
    %v1931 = vunpack.c.l.b16 %v1321
    %v1932 = vunpack.c.h.b16 %v1321
    %v1933 = vunpack.c.l.b16 %v1322
    %v1934 = vunpack.c.l.b16 %v1323
    %v1935 = vunpack.c.h.b16 %v1323
    %v1936 = vunpack.c.l.b16 %v1324
    %v1937 = vunpack.c.h.b16 %v1324
    %v1938 = vunpack.c.l.b16 %v1325
    %v1939 = vunpack.c.h.b16 %v1325
    %v1940 = vunpack.c.l.b16 %v1326
    %v1941 = vunpack.c.l.b16 %v1327
    %v1942 = vunpack.c.h.b16 %v1327
    %v1943 = vunpack.c.l.b16 %v1328
    %v1944 = vunpack.c.h.b16 %v1328
    %v1945 = vunpack.c.l.b16 %v1329
    %v1946 = vunpack.c.h.b16 %v1329
    %v1947 = vunpack.c.l.b16 %v1330
    %v1948 = vunpack.c.l.b16 %v1331
    %v1949 = vunpack.c.h.b16 %v1331
    %v1950 = vunpack.c.l.b16 %v1332
    %v1951 = vunpack.c.h.b16 %v1332
    %v1952 = vunpack.c.l.b16 %v1333
    %v1953 = vunpack.c.h.b16 %v1333
    %v1954 = vunpack.c.l.b16 %v1334
    %v1955 = vunpack.c.l.b16 %v1335
    %v1956 = vunpack.c.h.b16 %v1335
    %v1957 = vunpack.c.l.b16 %v1336
    %v1958 = vunpack.c.h.b16 %v1336
    %v1959 = vunpack.c.l.b16 %v1337
    %v1960 = vunpack.c.h.b16 %v1337
    %v1961 = vunpack.c.l.b16 %v1338
    %v1962 = vunpack.c.l.b16 %v1339
    %v1963 = vunpack.c.h.b16 %v1339
    %v1964 = vunpack.c.l.b16 %v1340
    %v1965 = vunpack.c.h.b16 %v1340
    %v1966 = vunpack.c.l.b16 %v1341
    %v1967 = vunpack.c.h.b16 %v1341
    %v1968 = vunpack.c.l.b16 %v1342
    %v1969 = vunpack.c.l.b16 %v1343
    %v1970 = vunpack.c.h.b16 %v1343
    %v1971 = vunpack.c.l.b16 %v1344
    %v1972 = vunpack.c.h.b16 %v1344
    %v1973 = vunpack.c.l.b16 %v1345
    %v1974 = vunpack.c.h.b16 %v1345
    %v1975 = vunpack.c.l.b16 %v1346
    %v1976 = vunpack.c.l.b16 %v1347
    %v1977 = vunpack.c.h.b16 %v1347
    %v1978 = vunpack.c.l.b16 %v1348
    %v1979 = vunpack.c.h.b16 %v1348
    %v1980 = vunpack.c.l.b16 %v1349
    %v1981 = vunpack.c.h.b16 %v1349
    %v1982 = vunpack.c.l.b16 %v1350
    %v1983 = vunpack.c.l.b16 %v1351
    %v1984 = vunpack.c.h.b16 %v1351
    %v1985 = vunpack.c.l.b16 %v1352
    %v1986 = vunpack.c.h.b16 %v1352
    %v1987 = vunpack.c.l.b16 %v1353
    %v1988 = vunpack.c.h.b16 %v1353
    %v1989 = vunpack.c.l.b16 %v1354
    %v1990 = vunpack.c.l.b16 %v1355
    %v1991 = vunpack.c.h.b16 %v1355
    %v1992 = vunpack.c.l.b16 %v1356
    %v1993 = vunpack.c.h.b16 %v1356
    %v1994 = vunpack.c.l.b16 %v1357
    %v1995 = vunpack.c.h.b16 %v1357
    %v1996 = vunpack.c.l.b16 %v1358
    %v1997 = vunpack.c.l.b16 %v1359
    %v1998 = vunpack.c.h.b16 %v1359
    %v1999 = vunpack.c.l.b16 %v1360
    %v2000 = vunpack.c.h.b16 %v1360
    %v2001 = vunpack.c.l.b16 %v1361
    %v2002 = vunpack.c.h.b16 %v1361
    %v2003 = vunpack.c.l.b16 %v1362
    %v2004 = vunpack.c.l.b16 %v1363
    %v2005 = vunpack.c.h.b16 %v1363
    %v2006 = vunpack.c.l.b16 %v1364
    %v2007 = vunpack.c.h.b16 %v1364
    %v2008 = vunpack.c.l.b16 %v1365
    %v2009 = vunpack.c.h.b16 %v1365
    %v2010 = vunpack.c.l.b16 %v1366
    %v2011 = vunpack.c.l.b16 %v1367
    %v2012 = vunpack.c.h.b16 %v1367
    %v2013 = vunpack.c.l.b16 %v1368
    %v2014 = vunpack.c.h.b16 %v1368
    %v2015 = vunpack.c.l.b16 %v1369
    %v2016 = vunpack.c.h.b16 %v1369
    %v2017 = vunpack.c.l.b16 %v1370
    %v2018 = vunpack.c.l.b16 %v1371
    %v2019 = vunpack.c.h.b16 %v1371
    %v2020 = vunpack.c.l.b16 %v1372
    %v2021 = vunpack.c.h.b16 %v1372
    %v2022 = vunpack.c.l.b16 %v1373
    %v2023 = vunpack.c.h.b16 %v1373
    %v2024 = vunpack.c.l.b16 %v1374
    %v2025 = vunpack.c.l.b16 %v1375
    %v2026 = vunpack.c.h.b16 %v1375
    %v2027 = vunpack.c.l.b16 %v1376
    %v2028 = vunpack.c.h.b16 %v1376
    %v2029 = vunpack.c.l.b16 %v1377
    %v2030 = vunpack.c.h.b16 %v1377
    %v2031 = vunpack.c.l.b16 %v1378
    %v2032 = vunpack.c.l.b16 %v1379
    %v2033 = vunpack.c.h.b16 %v1379
    %v2034 = vunpack.c.l.b16 %v1380
    %v2035 = vunpack.c.h.b16 %v1380
    %v2036 = vunpack.c.l.b16 %v1381
    %v2037 = vunpack.c.h.b16 %v1381
    %v2038 = vunpack.c.l.b16 %v1382
    %v2039 = vunpack.c.l.b16 %v1383
    %v2040 = vunpack.c.h.b16 %v1383
    %v2041 = vunpack.c.l.b16 %v1384
    %v2042 = vunpack.c.h.b16 %v1384
    %v2043 = vunpack.c.l.b16 %v1385
    %v2044 = vunpack.c.h.b16 %v1385
    %v2045 = vunpack.c.l.b16 %v1386
    %v2046 = vunpack.c.l.b16 %v1387
    %v2047 = vunpack.c.h.b16 %v1387
    %v2048 = vunpack.c.l.b16 %v1388
    %v2049 = vunpack.c.h.b16 %v1388
    %v2050 = vunpack.c.l.b16 %v1389
    %v2051 = vunpack.c.h.b16 %v1389
    %v2052 = vunpack.c.l.b16 %v1390
    %v2053 = vunpack.c.l.b16 %v1391
    %v2054 = vunpack.c.h.b16 %v1391
    %v2055 = vunpack.c.l.b16 %v1392
    %v2056 = vunpack.c.h.b16 %v1392
    %v2057 = vunpack.c.l.b16 %v1393
    %v2058 = vunpack.c.h.b16 %v1393
    %v2059 = vunpack.c.l.b16 %v1394
    %v2060 = vunpack.c.l.b16 %v1395
    %v2061 = vunpack.c.h.b16 %v1395
    %v2062 = vunpack.c.l.b16 %v1396
    %v2063 = vunpack.c.h.b16 %v1396
    %v2064 = vunpack.c.l.b16 %v1397
    %v2065 = vunpack.c.h.b16 %v1397
    %v2066 = vunpack.c.l.b16 %v1398
    %v2067 = vunpack.c.l.b16 %v1399
    %v2068 = vunpack.c.h.b16 %v1399
    %v2069 = vunpack.c.l.b16 %v1400
    %v2070 = vunpack.c.h.b16 %v1400
    %v2071 = vunpack.c.l.b16 %v1401
    %v2072 = vunpack.c.h.b16 %v1401
    %v2073 = vunpack.c.l.b16 %v1402
    %v2074 = vunpack.c.l.b16 %v1403
    %v2075 = vunpack.c.h.b16 %v1403
    %v2076 = vunpack.c.l.b16 %v1404
    %v2077 = vunpack.c.h.b16 %v1404
    %v2078 = vunpack.c.l.b16 %v1405
    %v2079 = vunpack.c.h.b16 %v1405
    %v2080 = vunpack.c.l.b16 %v1406
    %v2081 = vunpack.c.l.b16 %v1407
    %v2082 = vunpack.c.h.b16 %v1407
    %v2083 = vunpack.c.l.b16 %v1408
    %v2084 = vunpack.c.h.b16 %v1408
    %v2085 = vunpack.c.l.b16 %v1409
    %v2086 = vunpack.c.h.b16 %v1409
    %v2087 = vunpack.c.l.b16 %v1410
    %v2088 = vunpack.c.l.b16 %v1411
    %v2089 = vunpack.c.h.b16 %v1411
    %v2090 = vunpack.c.l.b16 %v1412
    %v2091 = vunpack.c.h.b16 %v1412
    %v2092 = vunpack.c.l.b16 %v1413
    %v2093 = vunpack.c.h.b16 %v1413
    %v2094 = vunpack.c.l.b16 %v1414
    %v2095 = vunpack.c.l.b16 %v1415
    %v2096 = vunpack.c.h.b16 %v1415
    %v2097 = vunpack.c.l.b16 %v1416
    %v2098 = vunpack.c.h.b16 %v1416
    %v2099 = vunpack.c.l.b16 %v1417
    %v2100 = vunpack.c.h.b16 %v1417
    %v2101 = vunpack.c.l.b16 %v1418
    %v2102 = vunpack.c.l.b16 %v1419
    %v2103 = vunpack.c.h.b16 %v1419
    %v2104 = vunpack.c.l.b16 %v1420
    %v2105 = vunpack.c.h.b16 %v1420
    %v2106 = vunpack.c.l.b16 %v1421
    %v2107 = vunpack.c.h.b16 %v1421
    %v2108 = vunpack.c.l.b16 %v1422
    %v2109 = vunpack.c.l.b16 %v1423
    %v2110 = vunpack.c.h.b16 %v1423
    %v2111 = vunpack.c.l.b16 %v1424
    %v2112 = vunpack.c.h.b16 %v1424
    %v2113 = vunpack.c.l.b16 %v1425
    %v2114 = vunpack.c.h.b16 %v1425
    %v2115 = vunpack.c.l.b16 %v1426
    %v2116 = vunpack.c.l.b16 %v1427
    %v2117 = vunpack.c.h.b16 %v1427
    %v2118 = vunpack.c.l.b16 %v1428
    %v2119 = vunpack.c.h.b16 %v1428
    %v2120 = vunpack.c.l.b16 %v1429
    %v2121 = vunpack.c.h.b16 %v1429
    %v2122 = vunpack.c.l.b16 %v1430
    %v2123 = vunpack.c.l.b16 %v1431
    %v2124 = vunpack.c.h.b16 %v1431
    %v2125 = vunpack.c.l.b16 %v1432
    %v2126 = vunpack.c.h.b16 %v1432
    %v2127 = vunpack.c.l.b16 %v1433
    %v2128 = vunpack.c.h.b16 %v1433
    %v2129 = vunpack.c.l.b16 %v1434
    %v2130 = vunpack.c.l.b16 %v1435
    %v2131 = vunpack.c.h.b16 %v1435
    %v2132 = vunpack.c.l.b16 %v1436
    %v2133 = vunpack.c.h.b16 %v1436
    %v2134 = vunpack.c.l.b16 %v1437
    %v2135 = vunpack.c.h.b16 %v1437
    %v2136 = vunpack.c.l.b16 %v1438
    %v2137 = vunpack.c.l.b16 %v1439
    %v2138 = vunpack.c.h.b16 %v1439
    %v2139 = vunpack.c.l.b16 %v1440
    %v2140 = vunpack.c.h.b16 %v1440
    %v2141 = vunpack.c.l.b16 %v1441
    %v2142 = vunpack.c.h.b16 %v1441
    %v2143 = vunpack.c.l.b16 %v1442
    %v2144 = vunpack.c.l.b16 %v1443
    %v2145 = vunpack.c.h.b16 %v1443
    %v2146 = vunpack.c.l.b16 %v1444
    %v2147 = vunpack.c.h.b16 %v1444
    %v2148 = vunpack.c.l.b16 %v1445
    %v2149 = vunpack.c.h.b16 %v1445
    %v2150 = vunpack.c.l.b16 %v1446
    %v2151 = vunpack.c.l.b16 %v1447
    %v2152 = vunpack.c.h.b16 %v1447
    %v2153 = vunpack.c.l.b16 %v1448
    %v2154 = vunpack.c.h.b16 %v1448
    %v2155 = vunpack.c.l.b16 %v1449
    %v2156 = vunpack.c.h.b16 %v1449
    %v2157 = vunpack.c.l.b16 %v1450
    %v2158 = vunpack.c.l.b16 %v1451
    %v2159 = vunpack.c.h.b16 %v1451
    %v2160 = vunpack.c.l.b16 %v1452
    %v2161 = vunpack.c.h.b16 %v1452
    %v2162 = vunpack.c.l.b16 %v1453
    %v2163 = vunpack.c.h.b16 %v1453
    %v2164 = vunpack.c.l.b16 %v1454
    %v2165 = vunpack.c.l.b16 %v1455
    %v2166 = vunpack.c.h.b16 %v1455
    %v2167 = vunpack.c.l.b16 %v1456
    %v2168 = vunpack.c.h.b16 %v1456
    %v2169 = vunpack.c.l.b16 %v1457
    %v2170 = vunpack.c.h.b16 %v1457
    %v2171 = vunpack.c.l.b16 %v1458
    %v2172 = vunpack.c.l.b16 %v1459
    %v2173 = vunpack.c.h.b16 %v1459
    %v2174 = vunpack.c.l.b16 %v1460
    %v2175 = vunpack.c.h.b16 %v1460
    %v2176 = vunpack.c.l.b16 %v1461
    %v2177 = vunpack.c.h.b16 %v1461
    %v2178 = vunpack.c.l.b16 %v1462
    %v2179 = vunpack.c.l.b16 %v1463
    %v2180 = vunpack.c.h.b16 %v1463
    %v2181 = vunpack.c.l.b16 %v1464
    %v2182 = vunpack.c.h.b16 %v1464
    %v2183 = vunpack.c.l.b16 %v1465
    %v2184 = vunpack.c.h.b16 %v1465
    %v2185 = vunpack.c.l.b16 %v1466
    %v2186 = vpack.c.b16 %v1745, %v1738
    %v2187 = vpack.c.b16 %v1746, %v1739
    %v2188 = vpack.c.b16 %v1747, %v1740
    %v2189 = vpack.c.b16 %v1748, %v1741
    %v2190 = vpack.c.b16 %v1749, %v1742
    %v2191 = vpack.c.b16 %v1750, %v1743
    %v2192 = vpack.c.b16 %v1751, %v1744
    %v2193 = vpack.c.b16 %v1759, %v1752
    %v2194 = vpack.c.b16 %v1760, %v1753
    %v2195 = vpack.c.b16 %v1761, %v1754
    %v2196 = vpack.c.b16 %v1762, %v1755
    %v2197 = vpack.c.b16 %v1763, %v1756
    %v2198 = vpack.c.b16 %v1764, %v1757
    %v2199 = vpack.c.b16 %v1765, %v1758
    %v2200 = vpack.c.b16 %v1773, %v1766
    %v2201 = vpack.c.b16 %v1774, %v1767
    %v2202 = vpack.c.b16 %v1775, %v1768
    %v2203 = vpack.c.b16 %v1776, %v1769
    %v2204 = vpack.c.b16 %v1777, %v1770
    %v2205 = vpack.c.b16 %v1778, %v1771
    %v2206 = vpack.c.b16 %v1779, %v1772
    %v2207 = vpack.c.b16 %v1787, %v1780
    %v2208 = vpack.c.b16 %v1788, %v1781
    %v2209 = vpack.c.b16 %v1789, %v1782
    %v2210 = vpack.c.b16 %v1790, %v1783
    %v2211 = vpack.c.b16 %v1791, %v1784
    %v2212 = vpack.c.b16 %v1792, %v1785
    %v2213 = vpack.c.b16 %v1793, %v1786
    %v2214 = vpack.c.b16 %v1801, %v1794
    %v2215 = vpack.c.b16 %v1802, %v1795
    %v2216 = vpack.c.b16 %v1803, %v1796
    %v2217 = vpack.c.b16 %v1804, %v1797
    %v2218 = vpack.c.b16 %v1805, %v1798
    %v2219 = vpack.c.b16 %v1806, %v1799
    %v2220 = vpack.c.b16 %v1807, %v1800
    %v2221 = vpack.c.b16 %v1815, %v1808
    %v2222 = vpack.c.b16 %v1816, %v1809
    %v2223 = vpack.c.b16 %v1817, %v1810
    %v2224 = vpack.c.b16 %v1818, %v1811
    %v2225 = vpack.c.b16 %v1819, %v1812
    %v2226 = vpack.c.b16 %v1820, %v1813
    %v2227 = vpack.c.b16 %v1821, %v1814
    %v2228 = vpack.c.b16 %v1829, %v1822
    %v2229 = vpack.c.b16 %v1830, %v1823
    %v2230 = vpack.c.b16 %v1831, %v1824
    %v2231 = vpack.c.b16 %v1832, %v1825
    %v2232 = vpack.c.b16 %v1833, %v1826
    %v2233 = vpack.c.b16 %v1834, %v1827
    %v2234 = vpack.c.b16 %v1835, %v1828
    %v2235 = vpack.c.b16 %v1843, %v1836
    %v2236 = vpack.c.b16 %v1844, %v1837
    %v2237 = vpack.c.b16 %v1845, %v1838
    %v2238 = vpack.c.b16 %v1846, %v1839
    %v2239 = vpack.c.b16 %v1847, %v1840
    %v2240 = vpack.c.b16 %v1848, %v1841
    %v2241 = vpack.c.b16 %v1849, %v1842
    %v2242 = vpack.c.b16 %v1857, %v1850
    %v2243 = vpack.c.b16 %v1858, %v1851
    %v2244 = vpack.c.b16 %v1859, %v1852
    %v2245 = vpack.c.b16 %v1860, %v1853
    %v2246 = vpack.c.b16 %v1861, %v1854
    %v2247 = vpack.c.b16 %v1862, %v1855
    %v2248 = vpack.c.b16 %v1863, %v1856
    %v2249 = vpack.c.b16 %v1871, %v1864
    %v2250 = vpack.c.b16 %v1872, %v1865
    %v2251 = vpack.c.b16 %v1873, %v1866
    %v2252 = vpack.c.b16 %v1874, %v1867
    %v2253 = vpack.c.b16 %v1875, %v1868
    %v2254 = vpack.c.b16 %v1876, %v1869
    %v2255 = vpack.c.b16 %v1877, %v1870
    %v2256 = vpack.c.b16 %v1885, %v1878
    %v2257 = vpack.c.b16 %v1886, %v1879
    %v2258 = vpack.c.b16 %v1887, %v1880
    %v2259 = vpack.c.b16 %v1888, %v1881
    %v2260 = vpack.c.b16 %v1889, %v1882
    %v2261 = vpack.c.b16 %v1890, %v1883
    %v2262 = vpack.c.b16 %v1891, %v1884
    %v2263 = vpack.c.b16 %v1899, %v1892
    %v2264 = vpack.c.b16 %v1900, %v1893
    %v2265 = vpack.c.b16 %v1901, %v1894
    %v2266 = vpack.c.b16 %v1902, %v1895
    %v2267 = vpack.c.b16 %v1903, %v1896
    %v2268 = vpack.c.b16 %v1904, %v1897
    %v2269 = vpack.c.b16 %v1905, %v1898
    %v2270 = vpack.c.b16 %v1913, %v1906
    %v2271 = vpack.c.b16 %v1914, %v1907
    %v2272 = vpack.c.b16 %v1915, %v1908
    %v2273 = vpack.c.b16 %v1916, %v1909
    %v2274 = vpack.c.b16 %v1917, %v1910
    %v2275 = vpack.c.b16 %v1918, %v1911
    %v2276 = vpack.c.b16 %v1919, %v1912
    %v2277 = vpack.c.b16 %v1927, %v1920
    %v2278 = vpack.c.b16 %v1928, %v1921
    %v2279 = vpack.c.b16 %v1929, %v1922
    %v2280 = vpack.c.b16 %v1930, %v1923
    %v2281 = vpack.c.b16 %v1931, %v1924
    %v2282 = vpack.c.b16 %v1932, %v1925
    %v2283 = vpack.c.b16 %v1933, %v1926
    %v2284 = vpack.c.b16 %v1941, %v1934
    %v2285 = vpack.c.b16 %v1942, %v1935
    %v2286 = vpack.c.b16 %v1943, %v1936
    %v2287 = vpack.c.b16 %v1944, %v1937
    %v2288 = vpack.c.b16 %v1945, %v1938
    %v2289 = vpack.c.b16 %v1946, %v1939
    %v2290 = vpack.c.b16 %v1947, %v1940
    %v2291 = vpack.c.b16 %v1955, %v1948
    %v2292 = vpack.c.b16 %v1956, %v1949
    %v2293 = vpack.c.b16 %v1957, %v1950
    %v2294 = vpack.c.b16 %v1958, %v1951
    %v2295 = vpack.c.b16 %v1959, %v1952
    %v2296 = vpack.c.b16 %v1960, %v1953
    %v2297 = vpack.c.b16 %v1961, %v1954
    %v2298 = vpack.c.b16 %v1969, %v1962
    %v2299 = vpack.c.b16 %v1970, %v1963
    %v2300 = vpack.c.b16 %v1971, %v1964
    %v2301 = vpack.c.b16 %v1972, %v1965
    %v2302 = vpack.c.b16 %v1973, %v1966
    %v2303 = vpack.c.b16 %v1974, %v1967
    %v2304 = vpack.c.b16 %v1975, %v1968
    %v2305 = vpack.c.b16 %v1983, %v1976
    %v2306 = vpack.c.b16 %v1984, %v1977
    %v2307 = vpack.c.b16 %v1985, %v1978
    %v2308 = vpack.c.b16 %v1986, %v1979
    %v2309 = vpack.c.b16 %v1987, %v1980
    %v2310 = vpack.c.b16 %v1988, %v1981
    %v2311 = vpack.c.b16 %v1989, %v1982
    %v2312 = vpack.c.b16 %v1997, %v1990
    %v2313 = vpack.c.b16 %v1998, %v1991
    %v2314 = vpack.c.b16 %v1999, %v1992
    %v2315 = vpack.c.b16 %v2000, %v1993
    %v2316 = vpack.c.b16 %v2001, %v1994
    %v2317 = vpack.c.b16 %v2002, %v1995
    %v2318 = vpack.c.b16 %v2003, %v1996
    %v2319 = vpack.c.b16 %v2011, %v2004
    %v2320 = vpack.c.b16 %v2012, %v2005
    %v2321 = vpack.c.b16 %v2013, %v2006
    %v2322 = vpack.c.b16 %v2014, %v2007
    %v2323 = vpack.c.b16 %v2015, %v2008
    %v2324 = vpack.c.b16 %v2016, %v2009
    %v2325 = vpack.c.b16 %v2017, %v2010
    %v2326 = vpack.c.b16 %v2025, %v2018
    %v2327 = vpack.c.b16 %v2026, %v2019
    %v2328 = vpack.c.b16 %v2027, %v2020
    %v2329 = vpack.c.b16 %v2028, %v2021
    %v2330 = vpack.c.b16 %v2029, %v2022
    %v2331 = vpack.c.b16 %v2030, %v2023
    %v2332 = vpack.c.b16 %v2031, %v2024
    %v2333 = vpack.c.b16 %v2039, %v2032
    %v2334 = vpack.c.b16 %v2040, %v2033
    %v2335 = vpack.c.b16 %v2041, %v2034
    %v2336 = vpack.c.b16 %v2042, %v2035
    %v2337 = vpack.c.b16 %v2043, %v2036
    %v2338 = vpack.c.b16 %v2044, %v2037
    %v2339 = vpack.c.b16 %v2045, %v2038
    %v2340 = vpack.c.b16 %v2053, %v2046
    %v2341 = vpack.c.b16 %v2054, %v2047
    %v2342 = vpack.c.b16 %v2055, %v2048
    %v2343 = vpack.c.b16 %v2056, %v2049
    %v2344 = vpack.c.b16 %v2057, %v2050
    %v2345 = vpack.c.b16 %v2058, %v2051
    %v2346 = vpack.c.b16 %v2059, %v2052
    %v2347 = vpack.c.b16 %v2067, %v2060
    %v2348 = vpack.c.b16 %v2068, %v2061
    %v2349 = vpack.c.b16 %v2069, %v2062
    %v2350 = vpack.c.b16 %v2070, %v2063
    %v2351 = vpack.c.b16 %v2071, %v2064
    %v2352 = vpack.c.b16 %v2072, %v2065
    %v2353 = vpack.c.b16 %v2073, %v2066
    %v2354 = vpack.c.b16 %v2081, %v2074
    %v2355 = vpack.c.b16 %v2082, %v2075
    %v2356 = vpack.c.b16 %v2083, %v2076
    %v2357 = vpack.c.b16 %v2084, %v2077
    %v2358 = vpack.c.b16 %v2085, %v2078
    %v2359 = vpack.c.b16 %v2086, %v2079
    %v2360 = vpack.c.b16 %v2087, %v2080
    %v2361 = vpack.c.b16 %v2095, %v2088
    %v2362 = vpack.c.b16 %v2096, %v2089
    %v2363 = vpack.c.b16 %v2097, %v2090
    %v2364 = vpack.c.b16 %v2098, %v2091
    %v2365 = vpack.c.b16 %v2099, %v2092
    %v2366 = vpack.c.b16 %v2100, %v2093
    %v2367 = vpack.c.b16 %v2101, %v2094
    %v2368 = vpack.c.b16 %v2109, %v2102
    %v2369 = vpack.c.b16 %v2110, %v2103
    %v2370 = vpack.c.b16 %v2111, %v2104
    %v2371 = vpack.c.b16 %v2112, %v2105
    %v2372 = vpack.c.b16 %v2113, %v2106
    %v2373 = vpack.c.b16 %v2114, %v2107
    %v2374 = vpack.c.b16 %v2115, %v2108
    %v2375 = vpack.c.b16 %v2123, %v2116
    %v2376 = vpack.c.b16 %v2124, %v2117
    %v2377 = vpack.c.b16 %v2125, %v2118
    %v2378 = vpack.c.b16 %v2126, %v2119
    %v2379 = vpack.c.b16 %v2127, %v2120
    %v2380 = vpack.c.b16 %v2128, %v2121
    %v2381 = vpack.c.b16 %v2129, %v2122
    %v2382 = vpack.c.b16 %v2137, %v2130
    %v2383 = vpack.c.b16 %v2138, %v2131
    %v2384 = vpack.c.b16 %v2139, %v2132
    %v2385 = vpack.c.b16 %v2140, %v2133
    %v2386 = vpack.c.b16 %v2141, %v2134
    %v2387 = vpack.c.b16 %v2142, %v2135
    %v2388 = vpack.c.b16 %v2143, %v2136
    %v2389 = vpack.c.b16 %v2151, %v2144
    %v2390 = vpack.c.b16 %v2152, %v2145
    %v2391 = vpack.c.b16 %v2153, %v2146
    %v2392 = vpack.c.b16 %v2154, %v2147
    %v2393 = vpack.c.b16 %v2155, %v2148
    %v2394 = vpack.c.b16 %v2156, %v2149
    %v2395 = vpack.c.b16 %v2157, %v2150
    %v2396 = vpack.c.b16 %v2165, %v2158
    %v2397 = vpack.c.b16 %v2166, %v2159
    %v2398 = vpack.c.b16 %v2167, %v2160
    %v2399 = vpack.c.b16 %v2168, %v2161
    %v2400 = vpack.c.b16 %v2169, %v2162
    %v2401 = vpack.c.b16 %v2170, %v2163
    %v2402 = vpack.c.b16 %v2171, %v2164
    %v2403 = vpack.c.b16 %v2179, %v2172
    %v2404 = vpack.c.b16 %v2180, %v2173
    %v2405 = vpack.c.b16 %v2181, %v2174
    %v2406 = vpack.c.b16 %v2182, %v2175
    %v2407 = vpack.c.b16 %v2183, %v2176
    %v2408 = vpack.c.b16 %v2184, %v2177
    %v2409 = vpack.c.b16 %v2185, %v2178
    %2634 = vmatpush.bf16.msra.mxu0 %v2235
    %2635 = vmatpush.bf16.msra.mxu0 %v2228
    %2636 = vmatpush.bf16.msra.mxu0 %v2221
    %2637 = vmatpush.bf16.msra.mxu0 %v2214
    %2638 = vmatpush.bf16.msra.mxu0 %v2207
    %2639 = vmatpush.bf16.msra.mxu0 %v2200
    %2640 = vmatpush.bf16.msra.mxu0 %v2193
    %2641 = vmatpush.bf16.msra.mxu0 %v2186
    %2642 = vmatmul.bf16.gmra.mxu0 %v1207
    %v2643 = vpop.f32.mrf.mxu0
    %v2644 = vadd.f32 %v1468, %v2643
    %v2645 = vpop.f32.mrf.mxu0
    %2646 = vdwg.mxu0
    %2647 = vmatpush.bf16.msra.mxu0 %v2291
    %2648 = vmatpush.bf16.msra.mxu0 %v2284
    %2649 = vmatpush.bf16.msra.mxu0 %v2277
    %2650 = vmatpush.bf16.msra.mxu0 %v2270
    %2651 = vmatpush.bf16.msra.mxu0 %v2263
    %2652 = vmatpush.bf16.msra.mxu0 %v2256
    %2653 = vmatpush.bf16.msra.mxu0 %v2249
    %2654 = vmatpush.bf16.msra.mxu0 %v2242
    %2655 = vmatmul.bf16.gmra.mxu0 %v1208
    %v2656 = vpop.f32.mrf.mxu0
    %v2657 = vadd.f32 %v2644, %v2656
    %v2658 = vpop.f32.mrf.mxu0
    %2659 = vdwg.mxu0
    %2660 = vmatpush.bf16.msra.mxu0 %v2347
    %2661 = vmatpush.bf16.msra.mxu0 %v2340
    %2662 = vmatpush.bf16.msra.mxu0 %v2333
    %2663 = vmatpush.bf16.msra.mxu0 %v2326
    %2664 = vmatpush.bf16.msra.mxu0 %v2319
    %2665 = vmatpush.bf16.msra.mxu0 %v2312
    %2666 = vmatpush.bf16.msra.mxu0 %v2305
    %2667 = vmatpush.bf16.msra.mxu0 %v2298
    %2668 = vmatmul.bf16.gmra.mxu0 %v1209
    %v2669 = vpop.f32.mrf.mxu0
    %v2670 = vadd.f32 %v2657, %v2669
    %v2671 = vpop.f32.mrf.mxu0
    %2672 = vdwg.mxu0
    %2673 = vmatpush.bf16.msra.mxu0 %v2403
    %2674 = vmatpush.bf16.msra.mxu0 %v2396
    %2675 = vmatpush.bf16.msra.mxu0 %v2389
    %2676 = vmatpush.bf16.msra.mxu0 %v2382
    %2677 = vmatpush.bf16.msra.mxu0 %v2375
    %2678 = vmatpush.bf16.msra.mxu0 %v2368
    %2679 = vmatpush.bf16.msra.mxu0 %v2361
    %2680 = vmatpush.bf16.msra.mxu0 %v2354
    %2681 = vmatmul.bf16.gmra.mxu0 %v1210
    %v2682 = vpop.f32.mrf.mxu0
    %v2683 = vadd.f32 %v2670, %v2682
    %v2684 = vpop.f32.mrf.mxu0
    %2685 = vdwg.mxu0
    %2686 = vmatpush.bf16.msra.mxu0 %v2236
    %2687 = vmatpush.bf16.msra.mxu0 %v2229
    %2688 = vmatpush.bf16.msra.mxu0 %v2222
    %2689 = vmatpush.bf16.msra.mxu0 %v2215
    %2690 = vmatpush.bf16.msra.mxu0 %v2208
    %2691 = vmatpush.bf16.msra.mxu0 %v2201
    %2692 = vmatpush.bf16.msra.mxu0 %v2194
    %2693 = vmatpush.bf16.msra.mxu0 %v2187
    %2694 = vmatmul.bf16.gmra.mxu0 %v1207
    %v2695 = vpop.f32.mrf.mxu0
    %v2696 = vadd.f32 %v1469, %v2695
    %v2697 = vpop.f32.mrf.mxu0
    %2698 = vdwg.mxu0
    %2699 = vmatpush.bf16.msra.mxu0 %v2292
    %2700 = vmatpush.bf16.msra.mxu0 %v2285
    %2701 = vmatpush.bf16.msra.mxu0 %v2278
    %2702 = vmatpush.bf16.msra.mxu0 %v2271
    %2703 = vmatpush.bf16.msra.mxu0 %v2264
    %2704 = vmatpush.bf16.msra.mxu0 %v2257
    %2705 = vmatpush.bf16.msra.mxu0 %v2250
    %2706 = vmatpush.bf16.msra.mxu0 %v2243
    %2707 = vmatmul.bf16.gmra.mxu0 %v1208
    %v2708 = vpop.f32.mrf.mxu0
    %v2709 = vadd.f32 %v2696, %v2708
    %v2710 = vpop.f32.mrf.mxu0
    %2711 = vdwg.mxu0
    %2712 = vmatpush.bf16.msra.mxu0 %v2348
    %2713 = vmatpush.bf16.msra.mxu0 %v2341
    %2714 = vmatpush.bf16.msra.mxu0 %v2334
    %2715 = vmatpush.bf16.msra.mxu0 %v2327
    %2716 = vmatpush.bf16.msra.mxu0 %v2320
    %2717 = vmatpush.bf16.msra.mxu0 %v2313
    %2718 = vmatpush.bf16.msra.mxu0 %v2306
    %2719 = vmatpush.bf16.msra.mxu0 %v2299
    %2720 = vmatmul.bf16.gmra.mxu0 %v1209
    %v2721 = vpop.f32.mrf.mxu0
    %v2722 = vadd.f32 %v2709, %v2721
    %v2723 = vpop.f32.mrf.mxu0
    %2724 = vdwg.mxu0
    %2725 = vmatpush.bf16.msra.mxu0 %v2404
    %2726 = vmatpush.bf16.msra.mxu0 %v2397
    %2727 = vmatpush.bf16.msra.mxu0 %v2390
    %2728 = vmatpush.bf16.msra.mxu0 %v2383
    %2729 = vmatpush.bf16.msra.mxu0 %v2376
    %2730 = vmatpush.bf16.msra.mxu0 %v2369
    %2731 = vmatpush.bf16.msra.mxu0 %v2362
    %2732 = vmatpush.bf16.msra.mxu0 %v2355
    %2733 = vmatmul.bf16.gmra.mxu0 %v1210
    %v2734 = vpop.f32.mrf.mxu0
    %v2735 = vadd.f32 %v2722, %v2734
    %v2736 = vpop.f32.mrf.mxu0
    %2737 = vdwg.mxu0
    %2738 = vmatpush.bf16.msra.mxu0 %v2237
    %2739 = vmatpush.bf16.msra.mxu0 %v2230
    %2740 = vmatpush.bf16.msra.mxu0 %v2223
    %2741 = vmatpush.bf16.msra.mxu0 %v2216
    %2742 = vmatpush.bf16.msra.mxu0 %v2209
    %2743 = vmatpush.bf16.msra.mxu0 %v2202
    %2744 = vmatpush.bf16.msra.mxu0 %v2195
    %2745 = vmatpush.bf16.msra.mxu0 %v2188
    %2746 = vmatmul.bf16.gmra.mxu0 %v1207
    %v2747 = vpop.f32.mrf.mxu0
    %v2748 = vadd.f32 %v1470, %v2747
    %v2749 = vpop.f32.mrf.mxu0
    %2750 = vdwg.mxu0
    %2751 = vmatpush.bf16.msra.mxu0 %v2293
    %2752 = vmatpush.bf16.msra.mxu0 %v2286
    %2753 = vmatpush.bf16.msra.mxu0 %v2279
    %2754 = vmatpush.bf16.msra.mxu0 %v2272
    %2755 = vmatpush.bf16.msra.mxu0 %v2265
    %2756 = vmatpush.bf16.msra.mxu0 %v2258
    %2757 = vmatpush.bf16.msra.mxu0 %v2251
    %2758 = vmatpush.bf16.msra.mxu0 %v2244
    %2759 = vmatmul.bf16.gmra.mxu0 %v1208
    %v2760 = vpop.f32.mrf.mxu0
    %v2761 = vadd.f32 %v2748, %v2760
    %v2762 = vpop.f32.mrf.mxu0
    %2763 = vdwg.mxu0
    %2764 = vmatpush.bf16.msra.mxu0 %v2349
    %2765 = vmatpush.bf16.msra.mxu0 %v2342
    %2766 = vmatpush.bf16.msra.mxu0 %v2335
    %2767 = vmatpush.bf16.msra.mxu0 %v2328
    %2768 = vmatpush.bf16.msra.mxu0 %v2321
    %2769 = vmatpush.bf16.msra.mxu0 %v2314
    %2770 = vmatpush.bf16.msra.mxu0 %v2307
    %2771 = vmatpush.bf16.msra.mxu0 %v2300
    %2772 = vmatmul.bf16.gmra.mxu0 %v1209
    %v2773 = vpop.f32.mrf.mxu0
    %v2774 = vadd.f32 %v2761, %v2773
    %v2775 = vpop.f32.mrf.mxu0
    %2776 = vdwg.mxu0
    %2777 = vmatpush.bf16.msra.mxu0 %v2405
    %2778 = vmatpush.bf16.msra.mxu0 %v2398
    %2779 = vmatpush.bf16.msra.mxu0 %v2391
    %2780 = vmatpush.bf16.msra.mxu0 %v2384
    %2781 = vmatpush.bf16.msra.mxu0 %v2377
    %2782 = vmatpush.bf16.msra.mxu0 %v2370
    %2783 = vmatpush.bf16.msra.mxu0 %v2363
    %2784 = vmatpush.bf16.msra.mxu0 %v2356
    %2785 = vmatmul.bf16.gmra.mxu0 %v1210
    %v2786 = vpop.f32.mrf.mxu0
    %v2787 = vadd.f32 %v2774, %v2786
    %v2788 = vpop.f32.mrf.mxu0
    %2789 = vdwg.mxu0
    %2790 = vmatpush.bf16.msra.mxu0 %v2238
    %2791 = vmatpush.bf16.msra.mxu0 %v2231
    %2792 = vmatpush.bf16.msra.mxu0 %v2224
    %2793 = vmatpush.bf16.msra.mxu0 %v2217
    %2794 = vmatpush.bf16.msra.mxu0 %v2210
    %2795 = vmatpush.bf16.msra.mxu0 %v2203
    %2796 = vmatpush.bf16.msra.mxu0 %v2196
    %2797 = vmatpush.bf16.msra.mxu0 %v2189
    %2798 = vmatmul.bf16.gmra.mxu0 %v1207
    %v2799 = vpop.f32.mrf.mxu0
    %v2800 = vadd.f32 %v1471, %v2799
    %v2801 = vpop.f32.mrf.mxu0
    %2802 = vdwg.mxu0
    %2803 = vmatpush.bf16.msra.mxu0 %v2294
    %2804 = vmatpush.bf16.msra.mxu0 %v2287
    %2805 = vmatpush.bf16.msra.mxu0 %v2280
    %2806 = vmatpush.bf16.msra.mxu0 %v2273
    %2807 = vmatpush.bf16.msra.mxu0 %v2266
    %2808 = vmatpush.bf16.msra.mxu0 %v2259
    %2809 = vmatpush.bf16.msra.mxu0 %v2252
    %2810 = vmatpush.bf16.msra.mxu0 %v2245
    %2811 = vmatmul.bf16.gmra.mxu0 %v1208
    %v2812 = vpop.f32.mrf.mxu0
    %v2813 = vadd.f32 %v2800, %v2812
    %v2814 = vpop.f32.mrf.mxu0
    %2815 = vdwg.mxu0
    %2816 = vmatpush.bf16.msra.mxu0 %v2350
    %2817 = vmatpush.bf16.msra.mxu0 %v2343
    %2818 = vmatpush.bf16.msra.mxu0 %v2336
    %2819 = vmatpush.bf16.msra.mxu0 %v2329
    %2820 = vmatpush.bf16.msra.mxu0 %v2322
    %2821 = vmatpush.bf16.msra.mxu0 %v2315
    %2822 = vmatpush.bf16.msra.mxu0 %v2308
    %2823 = vmatpush.bf16.msra.mxu0 %v2301
    %2824 = vmatmul.bf16.gmra.mxu0 %v1209
    %v2825 = vpop.f32.mrf.mxu0
    %v2826 = vadd.f32 %v2813, %v2825
    %v2827 = vpop.f32.mrf.mxu0
    %2828 = vdwg.mxu0
    %2829 = vmatpush.bf16.msra.mxu0 %v2406
    %2830 = vmatpush.bf16.msra.mxu0 %v2399
    %2831 = vmatpush.bf16.msra.mxu0 %v2392
    %2832 = vmatpush.bf16.msra.mxu0 %v2385
    %2833 = vmatpush.bf16.msra.mxu0 %v2378
    %2834 = vmatpush.bf16.msra.mxu0 %v2371
    %2835 = vmatpush.bf16.msra.mxu0 %v2364
    %2836 = vmatpush.bf16.msra.mxu0 %v2357
    %2837 = vmatmul.bf16.gmra.mxu0 %v1210
    %v2838 = vpop.f32.mrf.mxu0
    %v2839 = vadd.f32 %v2826, %v2838
    %v2840 = vpop.f32.mrf.mxu0
    %2841 = vdwg.mxu0
    %2842 = vmatpush.bf16.msra.mxu0 %v2239
    %2843 = vmatpush.bf16.msra.mxu0 %v2232
    %2844 = vmatpush.bf16.msra.mxu0 %v2225
    %2845 = vmatpush.bf16.msra.mxu0 %v2218
    %2846 = vmatpush.bf16.msra.mxu0 %v2211
    %2847 = vmatpush.bf16.msra.mxu0 %v2204
    %2848 = vmatpush.bf16.msra.mxu0 %v2197
    %2849 = vmatpush.bf16.msra.mxu0 %v2190
    %2850 = vmatmul.bf16.gmra.mxu0 %v1207
    %v2851 = vpop.f32.mrf.mxu0
    %v2852 = vadd.f32 %v1472, %v2851
    %v2853 = vpop.f32.mrf.mxu0
    %2854 = vdwg.mxu0
    %2855 = vmatpush.bf16.msra.mxu0 %v2295
    %2856 = vmatpush.bf16.msra.mxu0 %v2288
    %2857 = vmatpush.bf16.msra.mxu0 %v2281
    %2858 = vmatpush.bf16.msra.mxu0 %v2274
    %2859 = vmatpush.bf16.msra.mxu0 %v2267
    %2860 = vmatpush.bf16.msra.mxu0 %v2260
    %2861 = vmatpush.bf16.msra.mxu0 %v2253
    %2862 = vmatpush.bf16.msra.mxu0 %v2246
    %2863 = vmatmul.bf16.gmra.mxu0 %v1208
    %v2864 = vpop.f32.mrf.mxu0
    %v2865 = vadd.f32 %v2852, %v2864
    %v2866 = vpop.f32.mrf.mxu0
    %2867 = vdwg.mxu0
    %2868 = vmatpush.bf16.msra.mxu0 %v2351
    %2869 = vmatpush.bf16.msra.mxu0 %v2344
    %2870 = vmatpush.bf16.msra.mxu0 %v2337
    %2871 = vmatpush.bf16.msra.mxu0 %v2330
    %2872 = vmatpush.bf16.msra.mxu0 %v2323
    %2873 = vmatpush.bf16.msra.mxu0 %v2316
    %2874 = vmatpush.bf16.msra.mxu0 %v2309
    %2875 = vmatpush.bf16.msra.mxu0 %v2302
    %2876 = vmatmul.bf16.gmra.mxu0 %v1209
    %v2877 = vpop.f32.mrf.mxu0
    %v2878 = vadd.f32 %v2865, %v2877
    %v2879 = vpop.f32.mrf.mxu0
    %2880 = vdwg.mxu0
    %2881 = vmatpush.bf16.msra.mxu0 %v2407
    %2882 = vmatpush.bf16.msra.mxu0 %v2400
    %2883 = vmatpush.bf16.msra.mxu0 %v2393
    %2884 = vmatpush.bf16.msra.mxu0 %v2386
    %2885 = vmatpush.bf16.msra.mxu0 %v2379
    %2886 = vmatpush.bf16.msra.mxu0 %v2372
    %2887 = vmatpush.bf16.msra.mxu0 %v2365
    %2888 = vmatpush.bf16.msra.mxu0 %v2358
    %2889 = vmatmul.bf16.gmra.mxu0 %v1210
    %v2890 = vpop.f32.mrf.mxu0
    %v2891 = vadd.f32 %v2878, %v2890
    %v2892 = vpop.f32.mrf.mxu0
    %2893 = vdwg.mxu0
    %2894 = vmatpush.bf16.msra.mxu0 %v2240
    %2895 = vmatpush.bf16.msra.mxu0 %v2233
    %2896 = vmatpush.bf16.msra.mxu0 %v2226
    %2897 = vmatpush.bf16.msra.mxu0 %v2219
    %2898 = vmatpush.bf16.msra.mxu0 %v2212
    %2899 = vmatpush.bf16.msra.mxu0 %v2205
    %2900 = vmatpush.bf16.msra.mxu0 %v2198
    %2901 = vmatpush.bf16.msra.mxu0 %v2191
    %2902 = vmatmul.bf16.gmra.mxu0 %v1207
    %v2903 = vpop.f32.mrf.mxu0
    %v2904 = vadd.f32 %v1473, %v2903
    %v2905 = vpop.f32.mrf.mxu0
    %2906 = vdwg.mxu0
    %2907 = vmatpush.bf16.msra.mxu0 %v2296
    %2908 = vmatpush.bf16.msra.mxu0 %v2289
    %2909 = vmatpush.bf16.msra.mxu0 %v2282
    %2910 = vmatpush.bf16.msra.mxu0 %v2275
    %2911 = vmatpush.bf16.msra.mxu0 %v2268
    %2912 = vmatpush.bf16.msra.mxu0 %v2261
    %2913 = vmatpush.bf16.msra.mxu0 %v2254
    %2914 = vmatpush.bf16.msra.mxu0 %v2247
    %2915 = vmatmul.bf16.gmra.mxu0 %v1208
    %v2916 = vpop.f32.mrf.mxu0
    %v2917 = vadd.f32 %v2904, %v2916
    %v2918 = vpop.f32.mrf.mxu0
    %2919 = vdwg.mxu0
    %2920 = vmatpush.bf16.msra.mxu0 %v2352
    %2921 = vmatpush.bf16.msra.mxu0 %v2345
    %2922 = vmatpush.bf16.msra.mxu0 %v2338
    %2923 = vmatpush.bf16.msra.mxu0 %v2331
    %2924 = vmatpush.bf16.msra.mxu0 %v2324
    %2925 = vmatpush.bf16.msra.mxu0 %v2317
    %2926 = vmatpush.bf16.msra.mxu0 %v2310
    %2927 = vmatpush.bf16.msra.mxu0 %v2303
    %2928 = vmatmul.bf16.gmra.mxu0 %v1209
    %v2929 = vpop.f32.mrf.mxu0
    %v2930 = vadd.f32 %v2917, %v2929
    %v2931 = vpop.f32.mrf.mxu0
    %2932 = vdwg.mxu0
    %2933 = vmatpush.bf16.msra.mxu0 %v2408
    %2934 = vmatpush.bf16.msra.mxu0 %v2401
    %2935 = vmatpush.bf16.msra.mxu0 %v2394
    %2936 = vmatpush.bf16.msra.mxu0 %v2387
    %2937 = vmatpush.bf16.msra.mxu0 %v2380
    %2938 = vmatpush.bf16.msra.mxu0 %v2373
    %2939 = vmatpush.bf16.msra.mxu0 %v2366
    %2940 = vmatpush.bf16.msra.mxu0 %v2359
    %2941 = vmatmul.bf16.gmra.mxu0 %v1210
    %v2942 = vpop.f32.mrf.mxu0
    %v2943 = vadd.f32 %v2930, %v2942
    %v2944 = vpop.f32.mrf.mxu0
    %2945 = vdwg.mxu0
    %2946 = vmatpush.bf16.msra.mxu0 %v2241
    %2947 = vmatpush.bf16.msra.mxu0 %v2234
    %2948 = vmatpush.bf16.msra.mxu0 %v2227
    %2949 = vmatpush.bf16.msra.mxu0 %v2220
    %2950 = vmatpush.bf16.msra.mxu0 %v2213
    %2951 = vmatpush.bf16.msra.mxu0 %v2206
    %2952 = vmatpush.bf16.msra.mxu0 %v2199
    %2953 = vmatpush.bf16.msra.mxu0 %v2192
    %2954 = vmatmul.bf16.gmra.mxu0 %v1207
    %v2955 = vpop.f32.mrf.mxu0
    %v2956 = vadd.f32 %v1474, %v2955
    %v2957 = vpop.f32.mrf.mxu0
    %2958 = vdwg.mxu0
    %2959 = vmatpush.bf16.msra.mxu0 %v2297
    %2960 = vmatpush.bf16.msra.mxu0 %v2290
    %2961 = vmatpush.bf16.msra.mxu0 %v2283
    %2962 = vmatpush.bf16.msra.mxu0 %v2276
    %2963 = vmatpush.bf16.msra.mxu0 %v2269
    %2964 = vmatpush.bf16.msra.mxu0 %v2262
    %2965 = vmatpush.bf16.msra.mxu0 %v2255
    %2966 = vmatpush.bf16.msra.mxu0 %v2248
    %2967 = vmatmul.bf16.gmra.mxu0 %v1208
    %v2968 = vpop.f32.mrf.mxu0
    %v2969 = vadd.f32 %v2956, %v2968
    %v2970 = vpop.f32.mrf.mxu0
    %2971 = vdwg.mxu0
    %2972 = vmatpush.bf16.msra.mxu0 %v2353
    %2973 = vmatpush.bf16.msra.mxu0 %v2346
    %2974 = vmatpush.bf16.msra.mxu0 %v2339
    %2975 = vmatpush.bf16.msra.mxu0 %v2332
    %2976 = vmatpush.bf16.msra.mxu0 %v2325
    %2977 = vmatpush.bf16.msra.mxu0 %v2318
    %2978 = vmatpush.bf16.msra.mxu0 %v2311
    %2979 = vmatpush.bf16.msra.mxu0 %v2304
    %2980 = vmatmul.bf16.gmra.mxu0 %v1209
    %v2981 = vpop.f32.mrf.mxu0
    %v2982 = vadd.f32 %v2969, %v2981
    %v2983 = vpop.f32.mrf.mxu0
    %2984 = vdwg.mxu0
    %2985 = vmatpush.bf16.msra.mxu0 %v2409
    %2986 = vmatpush.bf16.msra.mxu0 %v2402
    %2987 = vmatpush.bf16.msra.mxu0 %v2395
    %2988 = vmatpush.bf16.msra.mxu0 %v2388
    %2989 = vmatpush.bf16.msra.mxu0 %v2381
    %2990 = vmatpush.bf16.msra.mxu0 %v2374
    %2991 = vmatpush.bf16.msra.mxu0 %v2367
    %2992 = vmatpush.bf16.msra.mxu0 %v2360
    %2993 = vmatmul.bf16.gmra.mxu0 %v1210
    %v2994 = vpop.f32.mrf.mxu0
    %v2995 = vadd.f32 %v2982, %v2994
    %v2996 = vpop.f32.mrf.mxu0
    %2997 = vdwg.mxu0
    %v2998 = vtanh.pop %v2683
    %v2999 = vtanh.pop %v2735
    %v3000 = vtanh.pop %v2787
    %v3001 = vtanh.pop %v2839
    %v3002 = vtanh.pop %v2891
    %v3003 = vtanh.pop %v2943
    %v3004 = vtanh.pop %v2995
    %3005 = vst [vmem:[#allocation16] sm:$0xff] %v2998
    %3006 = vst [vmem:[#allocation16 + $0x8] sm:$0xff] %v2999
    %3007 = vst [vmem:[#allocation16 + $0x10] sm:$0xff] %v3000
    %3008 = vst [vmem:[#allocation16 + $0x18] sm:$0xff] %v3001
    %3009 = vst [vmem:[#allocation16 + $0x20] sm:$0xff] %v3002
    %3010 = vst [vmem:[#allocation16 + $0x28] sm:$0xff] %v3003
    %3011 = vst [vmem:[#allocation16 + $0x30] sm:$0xff] %v3004
    // Predicated region
    $region66: #{tpu_custom_call.1} parent=1 // pred_check
      _
    $region67: #{tpu_custom_call.1} parent=1 // pred_check_branch
      %3013 = sbr.rel (0) target = $region69
    $region68: #{tpu_custom_call.1} parent=1 // pred_region
      %3015 = vsyncadd [#allocation4], 0
      %s3017 = sshll.u32 [#allocation16], 4
      %s3018 = int_to_ptr.vmem [resolvable:$true] %s3017
      %s3019 = sshll.u32 %s8, 4
      %s3020 = int_to_ptr.hbm [resolvable:$true] %s3019
      %3022 = dma.vmem_to_hbm [thread:$0]  %s3018, 896, %s3020, [#allocation4]
    $region69: #{tpu_custom_call.1} parent=1 // pred_fallthru
      _
    // Predicated region
    $region70: #{tpu_custom_call.1} parent=1 // pred_check
      _
    $region71: #{tpu_custom_call.1} parent=1 // pred_check_branch
      %3024 = sbr.rel (0) target = $region73
    $region72: #{tpu_custom_call.1} parent=1 // pred_region
      %3026 = dma.done [#allocation4], 896
    $region73: #{tpu_custom_call.1} parent=1 // pred_fallthru
      _
    %3027 = vsyncpa [#allocation3], 1
    %3028 = vsyncpa [#allocation6], 1
    %3029 = vsyncpa [#allocation9], 1
    %3030 = vsyncpa [#allocation12], 1
    %3031 = vsyncpa [#allocation15], 1
    %3032 = vsyncpa [#allocation4], 1

</llo_original>
